<compile_context>
chip_gen: v5e
topology: v5e:2x2
jax: 0.10.0
libtpu: 0.0.40
codegen_flags: <defaults>
</compile_context>

<pallas_src>
import functools

import jax
import jax.numpy as jnp
from jax.experimental import pallas as pl
from jax.experimental.pallas import tpu as pltpu

BN_EPS = 1e-5
LRELU_SLOPE = 0.2
LANE = 128                       # pad Cout / K to multiples of the lane width
TILE_M_MAX = 256                 # rows (N*Ho*Wo) per grid step (multiple of 8)
VMEM_LIMIT = 48 * 1024 * 1024    # sized against v7x's 64 MiB physical VMEM


def _round_up(x, m):
    return ((x + m - 1) // m) * m


def _pad_cols(a, target):
    pad = target - a.shape[-1]
    return jnp.pad(a, ((0, 0), (0, pad))) if pad > 0 else a


# --------------------------------------------------------------------------------------
# Pallas kernels
# --------------------------------------------------------------------------------------
def conv_stats_kernel(patches_ref, w_ref, y_ref, stats_ref):
    """Conv-as-GEMM tile (bf16 in, f32 accumulate) + per-tile BN partial sums."""
    y = jnp.dot(patches_ref[...], w_ref[...], preferred_element_type=jnp.float32)
    y_ref[...] = y
    s = jnp.sum(y, axis=0, keepdims=True)          # (1, Cpad)
    ss = jnp.sum(y * y, axis=0, keepdims=True)     # (1, Cpad)
    stats_ref[...] = jnp.concatenate([s, ss], axis=0)[None]   # (1, 2, Cpad)


def bn_lrelu_kernel(y_ref, scale_ref, shift_ref, out_ref):
    """Normalize (pre-folded scale/shift) + LeakyReLU(0.2); f32 math, bf16 store."""
    z = y_ref[...] * scale_ref[...] + shift_ref[...]
    out_ref[...] = jnp.where(z > 0, z, LRELU_SLOPE * z).astype(out_ref.dtype)


def conv_sigmoid_kernel(patches_ref, w_ref, out_ref):
    y = jnp.dot(patches_ref[...], w_ref[...], preferred_element_type=jnp.float32)
    out_ref[...] = jax.nn.sigmoid(y)


# --------------------------------------------------------------------------------------
# Pallas wrappers
# --------------------------------------------------------------------------------------
def pallas_conv_stats(patches, w2d, tile_m):
    m_pad, k_pad = patches.shape
    c_pad = w2d.shape[1]
    n_tiles = m_pad // tile_m
    return pl.pallas_call(
        conv_stats_kernel,
        out_shape=(
            jax.ShapeDtypeStruct((m_pad, c_pad), jnp.float32),      # raw conv output
            jax.ShapeDtypeStruct((n_tiles, 2, c_pad), jnp.float32), # per-tile sum / sumsq
        ),
        grid=(n_tiles,),
        in_specs=[
            pl.BlockSpec((tile_m, k_pad), lambda i: (i, 0)),
            pl.BlockSpec((k_pad, c_pad), lambda i: (0, 0)),         # grid-invariant weights
        ],
        out_specs=(
            pl.BlockSpec((tile_m, c_pad), lambda i: (i, 0)),
            pl.BlockSpec((1, 2, c_pad), lambda i: (i, 0, 0)),
        ),
        compiler_params=pltpu.CompilerParams(
            dimension_semantics=("parallel",),       # shard M across TCs on v7x
            vmem_limit_bytes=VMEM_LIMIT,
        ),
    )(patches, w2d)


def pallas_bn_lrelu(y, scale, shift, tile_m):
    m_pad, c_pad = y.shape
    n_tiles = m_pad // tile_m
    return pl.pallas_call(
        bn_lrelu_kernel,
        out_shape=jax.ShapeDtypeStruct((m_pad, c_pad), jnp.bfloat16),
        grid=(n_tiles,),
        in_specs=[
            pl.BlockSpec((tile_m, c_pad), lambda i: (i, 0)),
            pl.BlockSpec((1, c_pad), lambda i: (0, 0)),
            pl.BlockSpec((1, c_pad), lambda i: (0, 0)),
        ],
        out_specs=pl.BlockSpec((tile_m, c_pad), lambda i: (i, 0)),
        compiler_params=pltpu.CompilerParams(
            dimension_semantics=("parallel",),
            vmem_limit_bytes=VMEM_LIMIT,
        ),
    )(y, scale, shift)


def pallas_conv_sigmoid(patches, w2d):
    m, k_pad = patches.shape
    c_pad = w2d.shape[1]
    return pl.pallas_call(
        conv_sigmoid_kernel,
        out_shape=jax.ShapeDtypeStruct((m, c_pad), jnp.float32),
        grid=(1,),                                   # tiny GEMM: M == batch
        in_specs=[
            pl.BlockSpec((m, k_pad), lambda i: (0, 0)),
            pl.BlockSpec((k_pad, c_pad), lambda i: (0, 0)),
        ],
        out_specs=pl.BlockSpec((m, c_pad), lambda i: (0, 0)),
        compiler_params=pltpu.CompilerParams(
            dimension_semantics=("arbitrary",),
            vmem_limit_bytes=VMEM_LIMIT,
        ),
    )(patches, w2d)


# --------------------------------------------------------------------------------------
# JAX glue: NHWC im2col (K order = (kh, kw, Cin) -> matches pre-transposed weights),
# layer construction, parameter prep, full forward.
# --------------------------------------------------------------------------------------
def im2col_nhwc(x_nhwc, k, stride, pad):
    N, H, W, C = x_nhwc.shape
    xp = jnp.pad(x_nhwc, ((0, 0), (pad, pad), (pad, pad), (0, 0)))
    Ho = (H + 2 * pad - k) // stride + 1
    Wo = (W + 2 * pad - k) // stride + 1
    cols = []
    for i in range(k):
        for j in range(k):
            cols.append(xp[:, i : i + stride * Ho : stride, j : j + stride * Wo : stride, :])
    patches = jnp.stack(cols, axis=3)                       # (N, Ho, Wo, k*k, C)
    patches = patches.reshape(N * Ho * Wo, k * k * C)       # K index = (kh*k + kw)*C + c
    return patches, Ho, Wo


def conv_layer_shapes(nc, ndf, img_size, zdim):
    """Replicates the module's __init__ layer construction loop."""
    layers = [(nc, ndf)]
    csize = img_size // 2
    cndf = ndf
    while csize > 4:
        out_feat = min(cndf * 2, 256)
        layers.append((cndf, out_feat))
        cndf = out_feat
        csize = csize // 2
    return layers, cndf


def init_raw_params(key, nc, ndf, img_size, zdim):
    """PyTorch-layout parameters (DCGAN-style init), as the reference module would hold."""
    layers, cndf = conv_layer_shapes(nc, ndf, img_size, zdim)
    params = []
    for (cin, cout) in layers:
        key, kw, kg, kb = jax.random.split(key, 4)
        w = 0.02 * jax.random.normal(kw, (cout, cin, 4, 4), jnp.float32)
        gamma = 1.0 + 0.02 * jax.random.normal(kg, (1, cout), jnp.float32)
        beta = 0.02 * jax.random.normal(kb, (1, cout), jnp.float32)
        params.append(dict(w=w, gamma=gamma, beta=beta))
    key, kf = jax.random.split(key)
    w_final = 0.02 * jax.random.normal(kf, (zdim, cndf, 4, 4), jnp.float32)
    return params, w_final


def _prep_conv_weight(w_oihw, cin_pad, cout_pad):
    """(Cout, Cin, kh, kw) -> (K_pad, Cout_pad) bf16 with K rows ordered (kh, kw, cin)."""
    cout, cin, kh, kw = w_oihw.shape
    if cin_pad > cin:
        w_oihw = jnp.pad(w_oihw, ((0, 0), (0, cin_pad - cin), (0, 0), (0, 0)))
    w2d = jnp.transpose(w_oihw, (2, 3, 1, 0)).reshape(kh * kw * cin_pad, cout)
    k_pad = _round_up(w2d.shape[0], LANE)
    w2d = jnp.pad(w2d, ((0, k_pad - w2d.shape[0]), (0, cout_pad - cout)))
    return w2d.astype(jnp.bfloat16)


def prepare_params(raw_params, w_final_raw, nc):
    """One-time weight / BN-parameter padding + layout transform (done at init, not per call)."""
    layer_params = []
    cin_pad = nc                                  # first layer consumes the raw input channels
    for p in raw_params:
        cout = p["w"].shape[0]
        cout_pad = _round_up(cout, LANE)
        layer_params.append(dict(
            w2d=_prep_conv_weight(p["w"], cin_pad, cout_pad),
            gamma=jnp.pad(p["gamma"], ((0, 0), (0, cout_pad - cout))),
            beta=jnp.pad(p["beta"], ((0, 0), (0, cout_pad - cout))),
        ))
        cin_pad = cout_pad                        # activations are carried with padded channels
    zdim = w_final_raw.shape[0]
    w_final_2d = _prep_conv_weight(w_final_raw, cin_pad, _round_up(zdim, LANE))
    return layer_params, w_final_2d


def conv_bn_lrelu_layer(x_nhwc, w2d, gamma, beta):
    """One Conv(k4,s2,p1,no-bias) + BatchNorm2d(train) + LeakyReLU(0.2) block."""
    N = x_nhwc.shape[0]
    patches, Ho, Wo = im2col_nhwc(x_nhwc, k=4, stride=2, pad=1)     # bf16, (M, 16*Cin)
    m_true = patches.shape[0]
    k_pad, c_pad = w2d.shape
    patches = _pad_cols(patches, k_pad)                             # zero-pad K to 128 multiple

    tile_m = min(TILE_M_MAX, _round_up(m_true, 8))
    m_pad = _round_up(m_true, tile_m)
    if m_pad > m_true:                                              # zero rows: no effect on stats
        patches = jnp.pad(patches, ((0, m_pad - m_true), (0, 0)))

    y, partials = pallas_conv_stats(patches, w2d, tile_m)

    # Fold BN (training-mode batch stats, biased variance) into a single scale/shift pair.
    sums = jnp.sum(partials, axis=0)                                # (2, Cpad)
    inv_m = 1.0 / float(m_true)
    mean = sums[0] * inv_m
    var = jnp.maximum(sums[1] * inv_m - mean * mean, 0.0)
    scale = gamma * jax.lax.rsqrt(var + BN_EPS)                     # (1, Cpad); 0 on padded ch.
    shift = beta - mean[None, :] * scale                            # (1, Cpad)

    act = pallas_bn_lrelu(y, scale, shift, tile_m)                  # (Mpad, Cpad) bf16
    return act[:m_true].reshape(N, Ho, Wo, c_pad)                   # stays NHWC, channels padded


@functools.partial(jax.jit, static_argnames=("zdim",))
def encoders_forward(x_nchw, layer_params, w_final_2d, zdim):
    # Single layout change at the boundary: NCHW (PyTorch) -> NHWC, bf16 for the MXU.
    x = jnp.transpose(x_nchw, (0, 2, 3, 1)).astype(jnp.bfloat16)
    for p in layer_params:
        x = conv_bn_lrelu_layer(x, p["w2d"], p["gamma"], p["beta"])
    # Final conv: k=4, s=4, p=0 over the 4x4 map -> 1x1, then sigmoid.
    patches, _, _ = im2col_nhwc(x, k=4, stride=4, pad=0)            # (N, 16*Cpad)
    patches = _pad_cols(patches, w_final_2d.shape[0])
    z = pallas_conv_sigmoid(patches, w_final_2d)                    # (N, zdim_pad)
    return z[:, :zdim].reshape(-1, zdim)                            # == .view(-1, zdim)


if __name__ == "__main__":
    # opt: nc=4, ndf=8, imgSize=16, zdim=32  (small, consistent with the module)
    nc, ndf, img_size, zdim = 4, 8, 16, 32
    batch = 2

    key = jax.random.PRNGKey(0)
    key, kx = jax.random.split(key)
    x = jax.random.normal(kx, (batch, nc, img_size, img_size), jnp.float32)

    raw_params, w_final_raw = init_raw_params(key, nc, ndf, img_size, zdim)
    layer_params, w_final_2d = prepare_params(raw_params, w_final_raw, nc)

    z = encoders_forward(x, layer_params, w_final_2d, zdim=zdim)
    jax.block_until_ready(z)

    assert z.shape == (batch, zdim), z.shape
    assert bool(jnp.all(jnp.isfinite(z)))
    assert bool(jnp.all((z >= 0) & (z <= 1)))       # sigmoid output range
    print("KERNEL_OK")
</pallas_src>

<mosaic_0001>
module attributes {stable_mosaic.version = 11 : i64} {
  func.func @conv_stats_kernel(%arg0: i32, %arg1: memref<128x128xbf16, #tpu.memory_space<vmem>>, %arg2: memref<128x128xbf16, #tpu.memory_space<vmem>>, %arg3: memref<128x128xf32, #tpu.memory_space<vmem>>, %arg4: memref<1x2x128xf32, #tpu.memory_space<vmem>>) attributes {dimension_semantics = [#tpu.dimension_semantics<parallel>], iteration_bounds = array<i64: 1>, scalar_prefetch = 0 : i64, scratch_operands = 0 : i64, tpu.core_type = #tpu.core_type<tc>, window_params = [{transform_indices = @transform_0, window_bounds = array<i64: 128, 128>}, {pipeline_mode = #tpu.pipeline_mode<synchronous>, transform_indices = @transform_1, window_bounds = array<i64: 128, 128>}, {transform_indices = @transform_2, window_bounds = array<i64: 128, 128>}, {transform_indices = @transform_3, window_bounds = array<i64: 1, 2, 128>}]} {
    %c0 = arith.constant 0 : index
    %c0_0 = arith.constant 0 : index
    %0 = vector.load %arg1[%c0, %c0_0] : memref<128x128xbf16, #tpu.memory_space<vmem>>, vector<128x128xbf16>
    %c0_1 = arith.constant 0 : index
    %c0_2 = arith.constant 0 : index
    %1 = vector.load %arg2[%c0_1, %c0_2] : memref<128x128xbf16, #tpu.memory_space<vmem>>, vector<128x128xbf16>
    %cst = arith.constant dense<0.000000e+00> : vector<128x128xf32>
    %2 = tpu.matmul %0, %1, %cst {dimension_numbers = #tpu.dot_dimension_numbers<[1], [0], [0], [1], [0, 0, 1, 1], [], []>} : vector<128x128xbf16>, vector<128x128xbf16>, vector<128x128xf32> -> vector<128x128xf32>
    %c0_3 = arith.constant 0 : index
    %c0_4 = arith.constant 0 : index
    %3 = vector.load %arg3[%c0_3, %c0_4] : memref<128x128xf32, #tpu.memory_space<vmem>>, vector<128x128xf32>
    tpu.vector_store %arg3[%c0_3, %c0_4], %2 {strides = array<i32>} : memref<128x128xf32, #tpu.memory_space<vmem>>, vector<128x128xf32>,
    %cst_5 = arith.constant dense<0.000000e+00> : vector<128xf32>
    %4 = vector.multi_reduction <add>, %2, %cst_5 [0] : vector<128x128xf32> to vector<128xf32>
    %5 = vector.shape_cast %4 : vector<128xf32> to vector<1x128xf32>
    %6 = arith.mulf %2, %2 : vector<128x128xf32>
    %cst_6 = arith.constant dense<0.000000e+00> : vector<128xf32>
    %7 = vector.multi_reduction <add>, %6, %cst_6 [0] : vector<128x128xf32> to vector<128xf32>
    %8 = vector.shape_cast %7 : vector<128xf32> to vector<1x128xf32>
    %9 = tpu.concatenate %5, %8 in 0 : vector<1x128xf32>, vector<1x128xf32> -> vector<2x128xf32>
    %10 = vector.shape_cast %9 : vector<2x128xf32> to vector<1x2x128xf32>
    %c0_7 = arith.constant 0 : index
    %c0_8 = arith.constant 0 : index
    %c0_9 = arith.constant 0 : index
    %11 = vector.load %arg4[%c0_7, %c0_8, %c0_9] : memref<1x2x128xf32, #tpu.memory_space<vmem>>, vector<1x2x128xf32>
    tpu.vector_store %arg4[%c0_7, %c0_8, %c0_9], %10 {strides = array<i32>} : memref<1x2x128xf32, #tpu.memory_space<vmem>>, vector<1x2x128xf32>,
    return
  }
  func.func @transform_0(%arg0: i32) -> (i32, i32) {
    %c0_i32 = arith.constant 0 : i32
    %c0_i32_0 = arith.constant 0 : i32
    return %arg0, %c0_i32 : i32, i32
  }
  func.func @transform_1(%arg0: i32) -> (i32, i32) {
    %c0_i32 = arith.constant 0 : i32
    %c0_i32_0 = arith.constant 0 : i32
    %c0_i32_1 = arith.constant 0 : i32
    return %c0_i32, %c0_i32_0 : i32, i32
  }
  func.func @transform_2(%arg0: i32) -> (i32, i32) {
    %c0_i32 = arith.constant 0 : i32
    %c0_i32_0 = arith.constant 0 : i32
    return %arg0, %c0_i32 : i32, i32
  }
  func.func @transform_3(%arg0: i32) -> (i32, i32, i32) {
    %c0_i32 = arith.constant 0 : i32
    %c0_i32_0 = arith.constant 0 : i32
    %c0_i32_1 = arith.constant 0 : i32
    return %arg0, %c0_i32, %c0_i32_0 : i32, i32, i32
  }
}

module attributes {stable_mosaic.version = 11 : i64} {
  func.func @bn_lrelu_kernel(%arg0: i32, %arg1: memref<128x128xf32, #tpu.memory_space<vmem>>, %arg2: memref<1x128xf32, #tpu.memory_space<vmem>>, %arg3: memref<1x128xf32, #tpu.memory_space<vmem>>, %arg4: memref<128x128xbf16, #tpu.memory_space<vmem>>) attributes {dimension_semantics = [#tpu.dimension_semantics<parallel>], iteration_bounds = array<i64: 1>, scalar_prefetch = 0 : i64, scratch_operands = 0 : i64, tpu.core_type = #tpu.core_type<tc>, window_params = [{transform_indices = @transform_0, window_bounds = array<i64: 128, 128>}, {pipeline_mode = #tpu.pipeline_mode<synchronous>, transform_indices = @transform_1, window_bounds = array<i64: 1, 128>}, {pipeline_mode = #tpu.pipeline_mode<synchronous>, transform_indices = @transform_2, window_bounds = array<i64: 1, 128>}, {transform_indices = @transform_3, window_bounds = array<i64: 128, 128>}]} {
    %c0 = arith.constant 0 : index
    %c0_0 = arith.constant 0 : index
    %0 = vector.load %arg1[%c0, %c0_0] : memref<128x128xf32, #tpu.memory_space<vmem>>, vector<128x128xf32>
    %c0_1 = arith.constant 0 : index
    %c0_2 = arith.constant 0 : index
    %1 = vector.load %arg2[%c0_1, %c0_2] : memref<1x128xf32, #tpu.memory_space<vmem>>, vector<1x128xf32>
    %2 = vector.broadcast %1 : vector<1x128xf32> to vector<128x128xf32>
    %3 = arith.mulf %0, %2 : vector<128x128xf32>
    %c0_3 = arith.constant 0 : index
    %c0_4 = arith.constant 0 : index
    %4 = vector.load %arg3[%c0_3, %c0_4] : memref<1x128xf32, #tpu.memory_space<vmem>>, vector<1x128xf32>
    %5 = vector.broadcast %4 : vector<1x128xf32> to vector<128x128xf32>
    %6 = arith.addf %3, %5 : vector<128x128xf32>
    %cst = arith.constant 0.000000e+00 : f32
    %7 = vector.broadcast %cst : f32 to vector<128x128xf32>
    %8 = arith.cmpf ogt, %6, %7 : vector<128x128xf32>
    %cst_5 = arith.constant 2.000000e-01 : f32
    %9 = vector.broadcast %cst_5 : f32 to vector<128x128xf32>
    %10 = arith.mulf %9, %6 : vector<128x128xf32>
    %11 = arith.select %8, %6, %10 : vector<128x128xi1>, vector<128x128xf32>
    %12 = arith.truncf %11 : vector<128x128xf32> to vector<128x128xbf16>
    %c0_6 = arith.constant 0 : index
    %c0_7 = arith.constant 0 : index
    %13 = vector.load %arg4[%c0_6, %c0_7] : memref<128x128xbf16, #tpu.memory_space<vmem>>, vector<128x128xbf16>
    tpu.vector_store %arg4[%c0_6, %c0_7], %12 {strides = array<i32>} : memref<128x128xbf16, #tpu.memory_space<vmem>>, vector<128x128xbf16>,
    return
  }
  func.func @transform_0(%arg0: i32) -> (i32, i32) {
    %c0_i32 = arith.constant 0 : i32
    %c0_i32_0 = arith.constant 0 : i32
    return %arg0, %c0_i32 : i32, i32
  }
  func.func @transform_1(%arg0: i32) -> (i32, i32) {
    %c0_i32 = arith.constant 0 : i32
    %c0_i32_0 = arith.constant 0 : i32
    %c0_i32_1 = arith.constant 0 : i32
    return %c0_i32, %c0_i32_0 : i32, i32
  }
  func.func @transform_2(%arg0: i32) -> (i32, i32) {
    %c0_i32 = arith.constant 0 : i32
    %c0_i32_0 = arith.constant 0 : i32
    %c0_i32_1 = arith.constant 0 : i32
    return %c0_i32, %c0_i32_0 : i32, i32
  }
  func.func @transform_3(%arg0: i32) -> (i32, i32) {
    %c0_i32 = arith.constant 0 : i32
    %c0_i32_0 = arith.constant 0 : i32
    return %arg0, %c0_i32 : i32, i32
  }
}

module attributes {stable_mosaic.version = 11 : i64} {
  func.func @conv_stats_kernel(%arg0: i32, %arg1: memref<32x2048xbf16, #tpu.memory_space<vmem>>, %arg2: memref<2048x128xbf16, #tpu.memory_space<vmem>>, %arg3: memref<32x128xf32, #tpu.memory_space<vmem>>, %arg4: memref<1x2x128xf32, #tpu.memory_space<vmem>>) attributes {dimension_semantics = [#tpu.dimension_semantics<parallel>], iteration_bounds = array<i64: 1>, scalar_prefetch = 0 : i64, scratch_operands = 0 : i64, tpu.core_type = #tpu.core_type<tc>, window_params = [{transform_indices = @transform_0, window_bounds = array<i64: 32, 2048>}, {pipeline_mode = #tpu.pipeline_mode<synchronous>, transform_indices = @transform_1, window_bounds = array<i64: 2048, 128>}, {transform_indices = @transform_2, window_bounds = array<i64: 32, 128>}, {transform_indices = @transform_3, window_bounds = array<i64: 1, 2, 128>}]} {
    %c0 = arith.constant 0 : index
    %c0_0 = arith.constant 0 : index
    %0 = vector.load %arg1[%c0, %c0_0] : memref<32x2048xbf16, #tpu.memory_space<vmem>>, vector<32x2048xbf16>
    %c0_1 = arith.constant 0 : index
    %c0_2 = arith.constant 0 : index
    %1 = vector.load %arg2[%c0_1, %c0_2] : memref<2048x128xbf16, #tpu.memory_space<vmem>>, vector<2048x128xbf16>
    %cst = arith.constant dense<0.000000e+00> : vector<32x128xf32>
    %2 = tpu.matmul %0, %1, %cst {dimension_numbers = #tpu.dot_dimension_numbers<[1], [0], [0], [1], [0, 0, 1, 1], [], []>} : vector<32x2048xbf16>, vector<2048x128xbf16>, vector<32x128xf32> -> vector<32x128xf32>
    %c0_3 = arith.constant 0 : index
    %c0_4 = arith.constant 0 : index
    %3 = vector.load %arg3[%c0_3, %c0_4] : memref<32x128xf32, #tpu.memory_space<vmem>>, vector<32x128xf32>
    tpu.vector_store %arg3[%c0_3, %c0_4], %2 {strides = array<i32>} : memref<32x128xf32, #tpu.memory_space<vmem>>, vector<32x128xf32>,
    %cst_5 = arith.constant dense<0.000000e+00> : vector<128xf32>
    %4 = vector.multi_reduction <add>, %2, %cst_5 [0] : vector<32x128xf32> to vector<128xf32>
    %5 = vector.shape_cast %4 : vector<128xf32> to vector<1x128xf32>
    %6 = arith.mulf %2, %2 : vector<32x128xf32>
    %cst_6 = arith.constant dense<0.000000e+00> : vector<128xf32>
    %7 = vector.multi_reduction <add>, %6, %cst_6 [0] : vector<32x128xf32> to vector<128xf32>
    %8 = vector.shape_cast %7 : vector<128xf32> to vector<1x128xf32>
    %9 = tpu.concatenate %5, %8 in 0 : vector<1x128xf32>, vector<1x128xf32> -> vector<2x128xf32>
    %10 = vector.shape_cast %9 : vector<2x128xf32> to vector<1x2x128xf32>
    %c0_7 = arith.constant 0 : index
    %c0_8 = arith.constant 0 : index
    %c0_9 = arith.constant 0 : index
    %11 = vector.load %arg4[%c0_7, %c0_8, %c0_9] : memref<1x2x128xf32, #tpu.memory_space<vmem>>, vector<1x2x128xf32>
    tpu.vector_store %arg4[%c0_7, %c0_8, %c0_9], %10 {strides = array<i32>} : memref<1x2x128xf32, #tpu.memory_space<vmem>>, vector<1x2x128xf32>,
    return
  }
  func.func @transform_0(%arg0: i32) -> (i32, i32) {
    %c0_i32 = arith.constant 0 : i32
    %c0_i32_0 = arith.constant 0 : i32
    return %arg0, %c0_i32 : i32, i32
  }
  func.func @transform_1(%arg0: i32) -> (i32, i32) {
    %c0_i32 = arith.constant 0 : i32
    %c0_i32_0 = arith.constant 0 : i32
    %c0_i32_1 = arith.constant 0 : i32
    return %c0_i32, %c0_i32_0 : i32, i32
  }
  func.func @transform_2(%arg0: i32) -> (i32, i32) {
    %c0_i32 = arith.constant 0 : i32
    %c0_i32_0 = arith.constant 0 : i32
    return %arg0, %c0_i32 : i32, i32
  }
  func.func @transform_3(%arg0: i32) -> (i32, i32, i32) {
    %c0_i32 = arith.constant 0 : i32
    %c0_i32_0 = arith.constant 0 : i32
    %c0_i32_1 = arith.constant 0 : i32
    return %arg0, %c0_i32, %c0_i32_0 : i32, i32, i32
  }
}

module attributes {stable_mosaic.version = 11 : i64} {
  func.func @bn_lrelu_kernel(%arg0: i32, %arg1: memref<32x128xf32, #tpu.memory_space<vmem>>, %arg2: memref<1x128xf32, #tpu.memory_space<vmem>>, %arg3: memref<1x128xf32, #tpu.memory_space<vmem>>, %arg4: memref<32x128xbf16, #tpu.memory_space<vmem>>) attributes {dimension_semantics = [#tpu.dimension_semantics<parallel>], iteration_bounds = array<i64: 1>, scalar_prefetch = 0 : i64, scratch_operands = 0 : i64, tpu.core_type = #tpu.core_type<tc>, window_params = [{transform_indices = @transform_0, window_bounds = array<i64: 32, 128>}, {pipeline_mode = #tpu.pipeline_mode<synchronous>, transform_indices = @transform_1, window_bounds = array<i64: 1, 128>}, {pipeline_mode = #tpu.pipeline_mode<synchronous>, transform_indices = @transform_2, window_bounds = array<i64: 1, 128>}, {transform_indices = @transform_3, window_bounds = array<i64: 32, 128>}]} {
    %c0 = arith.constant 0 : index
    %c0_0 = arith.constant 0 : index
    %0 = vector.load %arg1[%c0, %c0_0] : memref<32x128xf32, #tpu.memory_space<vmem>>, vector<32x128xf32>
    %c0_1 = arith.constant 0 : index
    %c0_2 = arith.constant 0 : index
    %1 = vector.load %arg2[%c0_1, %c0_2] : memref<1x128xf32, #tpu.memory_space<vmem>>, vector<1x128xf32>
    %2 = vector.broadcast %1 : vector<1x128xf32> to vector<32x128xf32>
    %3 = arith.mulf %0, %2 : vector<32x128xf32>
    %c0_3 = arith.constant 0 : index
    %c0_4 = arith.constant 0 : index
    %4 = vector.load %arg3[%c0_3, %c0_4] : memref<1x128xf32, #tpu.memory_space<vmem>>, vector<1x128xf32>
    %5 = vector.broadcast %4 : vector<1x128xf32> to vector<32x128xf32>
    %6 = arith.addf %3, %5 : vector<32x128xf32>
    %cst = arith.constant 0.000000e+00 : f32
    %7 = vector.broadcast %cst : f32 to vector<32x128xf32>
    %8 = arith.cmpf ogt, %6, %7 : vector<32x128xf32>
    %cst_5 = arith.constant 2.000000e-01 : f32
    %9 = vector.broadcast %cst_5 : f32 to vector<32x128xf32>
    %10 = arith.mulf %9, %6 : vector<32x128xf32>
    %11 = arith.select %8, %6, %10 : vector<32x128xi1>, vector<32x128xf32>
    %12 = arith.truncf %11 : vector<32x128xf32> to vector<32x128xbf16>
    %c0_6 = arith.constant 0 : index
    %c0_7 = arith.constant 0 : index
    %13 = vector.load %arg4[%c0_6, %c0_7] : memref<32x128xbf16, #tpu.memory_space<vmem>>, vector<32x128xbf16>
    tpu.vector_store %arg4[%c0_6, %c0_7], %12 {strides = array<i32>} : memref<32x128xbf16, #tpu.memory_space<vmem>>, vector<32x128xbf16>,
    return
  }
  func.func @transform_0(%arg0: i32) -> (i32, i32) {
    %c0_i32 = arith.constant 0 : i32
    %c0_i32_0 = arith.constant 0 : i32
    return %arg0, %c0_i32 : i32, i32
  }
  func.func @transform_1(%arg0: i32) -> (i32, i32) {
    %c0_i32 = arith.constant 0 : i32
    %c0_i32_0 = arith.constant 0 : i32
    %c0_i32_1 = arith.constant 0 : i32
    return %c0_i32, %c0_i32_0 : i32, i32
  }
  func.func @transform_2(%arg0: i32) -> (i32, i32) {
    %c0_i32 = arith.constant 0 : i32
    %c0_i32_0 = arith.constant 0 : i32
    %c0_i32_1 = arith.constant 0 : i32
    return %c0_i32, %c0_i32_0 : i32, i32
  }
  func.func @transform_3(%arg0: i32) -> (i32, i32) {
    %c0_i32 = arith.constant 0 : i32
    %c0_i32_0 = arith.constant 0 : i32
    return %arg0, %c0_i32 : i32, i32
  }
}

module attributes {stable_mosaic.version = 11 : i64} {
  func.func @conv_sigmoid_kernel(%arg0: i32, %arg1: memref<2x2048xbf16, #tpu.memory_space<vmem>>, %arg2: memref<2048x128xbf16, #tpu.memory_space<vmem>>, %arg3: memref<2x128xf32, #tpu.memory_space<vmem>>) attributes {dimension_semantics = [#tpu.dimension_semantics<arbitrary>], iteration_bounds = array<i64: 1>, scalar_prefetch = 0 : i64, scratch_operands = 0 : i64, tpu.core_type = #tpu.core_type<tc>, window_params = [{pipeline_mode = #tpu.pipeline_mode<synchronous>, transform_indices = @transform_0, window_bounds = array<i64: 2, 2048>}, {pipeline_mode = #tpu.pipeline_mode<synchronous>, transform_indices = @transform_1, window_bounds = array<i64: 2048, 128>}, {pipeline_mode = #tpu.pipeline_mode<synchronous>, transform_indices = @transform_2, window_bounds = array<i64: 2, 128>}]} {
    %c0 = arith.constant 0 : index
    %c0_0 = arith.constant 0 : index
    %0 = vector.load %arg1[%c0, %c0_0] : memref<2x2048xbf16, #tpu.memory_space<vmem>>, vector<2x2048xbf16>
    %c0_1 = arith.constant 0 : index
    %c0_2 = arith.constant 0 : index
    %1 = vector.load %arg2[%c0_1, %c0_2] : memref<2048x128xbf16, #tpu.memory_space<vmem>>, vector<2048x128xbf16>
    %cst = arith.constant dense<0.000000e+00> : vector<2x128xf32>
    %2 = tpu.matmul %0, %1, %cst {dimension_numbers = #tpu.dot_dimension_numbers<[1], [0], [0], [1], [0, 0, 1, 1], [], []>} : vector<2x2048xbf16>, vector<2048x128xbf16>, vector<2x128xf32> -> vector<2x128xf32>
    %3 = arith.negf %2 : vector<2x128xf32>
    %4 = math.exp %3 : vector<2x128xf32>
    %cst_3 = arith.constant 1.000000e+00 : f32
    %5 = vector.broadcast %cst_3 : f32 to vector<2x128xf32>
    %6 = arith.addf %5, %4 : vector<2x128xf32>
    %7 = arith.divf %5, %6 : vector<2x128xf32>
    %c0_4 = arith.constant 0 : index
    %c0_5 = arith.constant 0 : index
    %8 = vector.load %arg3[%c0_4, %c0_5] : memref<2x128xf32, #tpu.memory_space<vmem>>, vector<2x128xf32>
    tpu.vector_store %arg3[%c0_4, %c0_5], %7 {strides = array<i32>} : memref<2x128xf32, #tpu.memory_space<vmem>>, vector<2x128xf32>,
    return
  }
  func.func @transform_0(%arg0: i32) -> (i32, i32) {
    %c0_i32 = arith.constant 0 : i32
    %c0_i32_0 = arith.constant 0 : i32
    %c0_i32_1 = arith.constant 0 : i32
    return %c0_i32, %c0_i32_0 : i32, i32
  }
  func.func @transform_1(%arg0: i32) -> (i32, i32) {
    %c0_i32 = arith.constant 0 : i32
    %c0_i32_0 = arith.constant 0 : i32
    %c0_i32_1 = arith.constant 0 : i32
    return %c0_i32, %c0_i32_0 : i32, i32
  }
  func.func @transform_2(%arg0: i32) -> (i32, i32) {
    %c0_i32 = arith.constant 0 : i32
    %c0_i32_0 = arith.constant 0 : i32
    %c0_i32_1 = arith.constant 0 : i32
    return %c0_i32, %c0_i32_0 : i32, i32
  }
}

</mosaic_0001>

<llo_original>
// kernel: encoders_forward.5
$region0: #{encoders_forward.5}
  #allocation0 [shape = 'u32[]', space=smem, size = 0x4, offset = 0x4, fixed_abs, tag = 'smem constant byte address 0x4 - core index']
  #allocation1 [shape = 'u32[72,128]{1,0:T(1,128)}', space=vmem, size = 0x9000, scoped, tag = 'internal scratch']
  %s0 = inlined_call_operand.vmem [shape: bf16[128,128], index: 0, kind: input, shape index: {}]
  %s1 = inlined_call_operand.vmem [shape: bf16[128,128], index: 1, kind: input, shape index: {}]
  %s2 = inlined_call_operand.vmem [shape: f32[128,128], index: 2, kind: output, shape index: {0}]
  %s3 = inlined_call_operand.vmem [shape: f32[1,2,128], index: 3, kind: output, shape index: {1}]
  %4 = xla_tuple %s2, %s3
  %s5 = sld [smem:[#allocation0]]
  $region26: #{encoders_forward.5} parent=0
    _
  %s7 = ssub.s32 1, %s5
  %s8 = scalar_select 0, %s7, %s5
  // Predicated region
  $region2: #{encoders_forward.5} parent=0 // pred_check
    _
  $region3: #{encoders_forward.5} parent=0 // pred_check_branch
    %10 = sbr.rel (0) target = $region5
  $region4: #{encoders_forward.5} parent=0 // pred_region
    _
  $region5: #{encoders_forward.5} parent=0 // pred_fallthru
    _
  // Predicated region
  $region6: #{encoders_forward.5} parent=0 // pred_check
    _
  $region7: #{encoders_forward.5} parent=0 // pred_check_branch
    %12 = sbr.rel (0) target = $region9
  $region8: #{encoders_forward.5} parent=0 // pred_region
    _
  $region9: #{encoders_forward.5} parent=0 // pred_fallthru
    _
  %v13 = vld [vmem:[%s0] sm:$0xf]
  %v14 = vld [vmem:[%s0 + $0x4] sm:$0xf]
  %v15 = vld [vmem:[%s0 + $0x8] sm:$0xf]
  %v16 = vld [vmem:[%s0 + $0xc] sm:$0xf]
  %v17 = vld [vmem:[%s0 + $0x10] sm:$0xf]
  %v18 = vld [vmem:[%s0 + $0x14] sm:$0xf]
  %v19 = vld [vmem:[%s0 + $0x18] sm:$0xf]
  %v20 = vld [vmem:[%s0 + $0x1c] sm:$0xf]
  %v21 = vld [vmem:[%s0 + $0x20] sm:$0xf]
  %v22 = vld [vmem:[%s0 + $0x24] sm:$0xf]
  %v23 = vld [vmem:[%s0 + $0x28] sm:$0xf]
  %v24 = vld [vmem:[%s0 + $0x2c] sm:$0xf]
  %v25 = vld [vmem:[%s0 + $0x30] sm:$0xf]
  %v26 = vld [vmem:[%s0 + $0x34] sm:$0xf]
  %v27 = vld [vmem:[%s0 + $0x38] sm:$0xf]
  %v28 = vld [vmem:[%s0 + $0x3c] sm:$0xf]
  %v29 = vld [vmem:[%s1] sm:$0xf]
  %v30 = vld [vmem:[%s1 + $0x4] sm:$0xf]
  %v31 = vld [vmem:[%s1 + $0x8] sm:$0xf]
  %v32 = vld [vmem:[%s1 + $0xc] sm:$0xf]
  %v33 = vld [vmem:[%s1 + $0x10] sm:$0xf]
  %v34 = vld [vmem:[%s1 + $0x14] sm:$0xf]
  %v35 = vld [vmem:[%s1 + $0x18] sm:$0xf]
  %v36 = vld [vmem:[%s1 + $0x1c] sm:$0xf]
  %v37 = vld [vmem:[%s1 + $0x20] sm:$0xf]
  %v38 = vld [vmem:[%s1 + $0x24] sm:$0xf]
  %v39 = vld [vmem:[%s1 + $0x28] sm:$0xf]
  %v40 = vld [vmem:[%s1 + $0x2c] sm:$0xf]
  %v41 = vld [vmem:[%s1 + $0x30] sm:$0xf]
  %v42 = vld [vmem:[%s1 + $0x34] sm:$0xf]
  %v43 = vld [vmem:[%s1 + $0x38] sm:$0xf]
  %v44 = vld [vmem:[%s1 + $0x3c] sm:$0xf]
  %v61 = vunpack.c.l.b16 %v13
  %v62 = vunpack.c.l.b16 %v14
  %v63 = vunpack.c.l.b16 %v15
  %v64 = vunpack.c.l.b16 %v16
  %v65 = vunpack.c.l.b16 %v17
  %v66 = vunpack.c.l.b16 %v18
  %v67 = vunpack.c.l.b16 %v19
  %v68 = vunpack.c.l.b16 %v20
  %v69 = vunpack.c.l.b16 %v21
  %v70 = vunpack.c.l.b16 %v22
  %v71 = vunpack.c.l.b16 %v23
  %v72 = vunpack.c.l.b16 %v24
  %v73 = vunpack.c.l.b16 %v25
  %v74 = vunpack.c.l.b16 %v26
  %v75 = vunpack.c.l.b16 %v27
  %v76 = vunpack.c.l.b16 %v28
  %v77 = vpack.c.b16 %v62, %v61
  %v78 = vpack.c.b16 %v64, %v63
  %v79 = vpack.c.b16 %v66, %v65
  %v80 = vpack.c.b16 %v68, %v67
  %v81 = vpack.c.b16 %v70, %v69
  %v82 = vpack.c.b16 %v72, %v71
  %v83 = vpack.c.b16 %v74, %v73
  %v84 = vpack.c.b16 %v76, %v75
  %v109 = vunpack.c.l.b16 %v29
  %v110 = vunpack.c.l.b16 %v30
  %v111 = vunpack.c.l.b16 %v31
  %v112 = vunpack.c.l.b16 %v32
  %v113 = vunpack.c.l.b16 %v33
  %v114 = vunpack.c.l.b16 %v34
  %v115 = vunpack.c.l.b16 %v35
  %v116 = vunpack.c.l.b16 %v36
  %v117 = vunpack.c.l.b16 %v37
  %v118 = vunpack.c.l.b16 %v38
  %v119 = vunpack.c.l.b16 %v39
  %v120 = vunpack.c.l.b16 %v40
  %v121 = vunpack.c.l.b16 %v41
  %v122 = vunpack.c.l.b16 %v42
  %v123 = vunpack.c.l.b16 %v43
  %v124 = vunpack.c.l.b16 %v44
  %v125 = vpack.c.b16 %v110, %v109
  %v126 = vpack.c.b16 %v112, %v111
  %v127 = vpack.c.b16 %v114, %v113
  %v128 = vpack.c.b16 %v116, %v115
  %v129 = vpack.c.b16 %v118, %v117
  %v130 = vpack.c.b16 %v120, %v119
  %v131 = vpack.c.b16 %v122, %v121
  %v132 = vpack.c.b16 %v124, %v123
  %141 = vmatpush.bf16.msra.mxu0 %v132
  %142 = vmatpush.bf16.msra.mxu0 %v131
  %143 = vmatpush.bf16.msra.mxu0 %v130
  %144 = vmatpush.bf16.msra.mxu0 %v129
  %145 = vmatpush.bf16.msra.mxu0 %v128
  %146 = vmatpush.bf16.msra.mxu0 %v127
  %147 = vmatpush.bf16.msra.mxu0 %v126
  %148 = vmatpush.bf16.msra.mxu0 %v125
  %149 = vmatmul.bf16.gmra.mxu0 %v77
  %v150 = vpop.f32.mrf.mxu0
  %v151 = vadd.f32 0.0, %v150
  %v152 = vpop.f32.mrf.mxu0
  %v153 = vadd.f32 0.0, %v152
  %154 = vmatmul.bf16.gmra.mxu0 %v78
  %v155 = vpop.f32.mrf.mxu0
  %v156 = vadd.f32 0.0, %v155
  %v157 = vpop.f32.mrf.mxu0
  %v158 = vadd.f32 0.0, %v157
  %159 = vmatmul.bf16.gmra.mxu0 %v79
  %v160 = vpop.f32.mrf.mxu0
  %v161 = vadd.f32 0.0, %v160
  %v162 = vpop.f32.mrf.mxu0
  %v163 = vadd.f32 0.0, %v162
  %164 = vmatmul.bf16.gmra.mxu0 %v80
  %v165 = vpop.f32.mrf.mxu0
  %v166 = vadd.f32 0.0, %v165
  %v167 = vpop.f32.mrf.mxu0
  %v168 = vadd.f32 0.0, %v167
  %169 = vmatmul.bf16.gmra.mxu0 %v81
  %v170 = vpop.f32.mrf.mxu0
  %v171 = vadd.f32 0.0, %v170
  %v172 = vpop.f32.mrf.mxu0
  %v173 = vadd.f32 0.0, %v172
  %174 = vmatmul.bf16.gmra.mxu0 %v82
  %v175 = vpop.f32.mrf.mxu0
  %v176 = vadd.f32 0.0, %v175
  %v177 = vpop.f32.mrf.mxu0
  %v178 = vadd.f32 0.0, %v177
  %179 = vmatmul.bf16.gmra.mxu0 %v83
  %v180 = vpop.f32.mrf.mxu0
  %v181 = vadd.f32 0.0, %v180
  %v182 = vpop.f32.mrf.mxu0
  %v183 = vadd.f32 0.0, %v182
  %184 = vmatmul.bf16.gmra.mxu0 %v84
  %v185 = vpop.f32.mrf.mxu0
  %v186 = vadd.f32 0.0, %v185
  %v187 = vpop.f32.mrf.mxu0
  %v188 = vadd.f32 0.0, %v187
  %189 = vdwg.mxu0
  %190 = vst [vmem:[%s2] sm:$0xff] %v151
  %191 = vst [vmem:[%s2 + $0x8] sm:$0xff] %v153
  %192 = vst [vmem:[%s2 + $0x10] sm:$0xff] %v156
  %193 = vst [vmem:[%s2 + $0x18] sm:$0xff] %v158
  %194 = vst [vmem:[%s2 + $0x20] sm:$0xff] %v161
  %195 = vst [vmem:[%s2 + $0x28] sm:$0xff] %v163
  %196 = vst [vmem:[%s2 + $0x30] sm:$0xff] %v166
  %197 = vst [vmem:[%s2 + $0x38] sm:$0xff] %v168
  %198 = vst [vmem:[%s2 + $0x40] sm:$0xff] %v171
  %199 = vst [vmem:[%s2 + $0x48] sm:$0xff] %v173
  %200 = vst [vmem:[%s2 + $0x50] sm:$0xff] %v176
  %201 = vst [vmem:[%s2 + $0x58] sm:$0xff] %v178
  %202 = vst [vmem:[%s2 + $0x60] sm:$0xff] %v181
  %203 = vst [vmem:[%s2 + $0x68] sm:$0xff] %v183
  %204 = vst [vmem:[%s2 + $0x70] sm:$0xff] %v186
  %205 = vst [vmem:[%s2 + $0x78] sm:$0xff] %v188
  %v206 = vadd.f32 %v151, %v153
  %v207 = vadd.f32 %v206, %v156
  %v208 = vadd.f32 %v207, %v158
  %v209 = vadd.f32 %v208, %v161
  %v210 = vadd.f32 %v209, %v163
  %v211 = vadd.f32 %v210, %v166
  %v212 = vadd.f32 %v211, %v168
  %v213 = vadd.f32 %v212, %v171
  %v214 = vadd.f32 %v213, %v173
  %v215 = vadd.f32 %v214, %v176
  %v216 = vadd.f32 %v215, %v178
  %v217 = vadd.f32 %v216, %v181
  %v218 = vadd.f32 %v217, %v183
  %v219 = vadd.f32 %v218, %v186
  %v220 = vadd.f32 %v219, %v188
  %v221 = vrot.slane %v220, 4
  %v222 = vadd.f32 %v220, %v221
  %v223 = vrot.slane %v222, 2
  %v224 = vadd.f32 %v222, %v223
  %v225 = vrot.slane %v224, 1
  %v226 = vadd.f32 %v224, %v225
  %v227 = vmul.f32 %v151, %v151
  %v228 = vmul.f32 %v153, %v153
  %v229 = vmul.f32 %v156, %v156
  %v230 = vmul.f32 %v158, %v158
  %v231 = vmul.f32 %v161, %v161
  %v232 = vmul.f32 %v163, %v163
  %v233 = vmul.f32 %v166, %v166
  %v234 = vmul.f32 %v168, %v168
  %v235 = vmul.f32 %v171, %v171
  %v236 = vmul.f32 %v173, %v173
  %v237 = vmul.f32 %v176, %v176
  %v238 = vmul.f32 %v178, %v178
  %v239 = vmul.f32 %v181, %v181
  %v240 = vmul.f32 %v183, %v183
  %v241 = vmul.f32 %v186, %v186
  %v242 = vmul.f32 %v188, %v188
  %v243 = vadd.f32 %v227, %v228
  %v244 = vadd.f32 %v243, %v229
  %v245 = vadd.f32 %v244, %v230
  %v246 = vadd.f32 %v245, %v231
  %v247 = vadd.f32 %v246, %v232
  %v248 = vadd.f32 %v247, %v233
  %v249 = vadd.f32 %v248, %v234
  %v250 = vadd.f32 %v249, %v235
  %v251 = vadd.f32 %v250, %v236
  %v252 = vadd.f32 %v251, %v237
  %v253 = vadd.f32 %v252, %v238
  %v254 = vadd.f32 %v253, %v239
  %v255 = vadd.f32 %v254, %v240
  %v256 = vadd.f32 %v255, %v241
  %v257 = vadd.f32 %v256, %v242
  %v258 = vrot.slane %v257, 4
  %v259 = vadd.f32 %v257, %v258
  %v260 = vrot.slane %v259, 2
  %v261 = vadd.f32 %v259, %v260
  %v262 = vrot.slane %v261, 1
  %v263 = vadd.f32 %v261, %v262
  %vm264 = vcmask 1040384
  %v265 = vsel %vm264, %v226, %v263
  %266 = vst [vmem:[%s3] sm:$0x3] %v265
  // Predicated region
  $region10: #{encoders_forward.5} parent=0 // pred_check
    _
  $region11: #{encoders_forward.5} parent=0 // pred_check_branch
    %268 = sbr.rel (0) target = $region13
  $region12: #{encoders_forward.5} parent=0 // pred_region
    _
  $region13: #{encoders_forward.5} parent=0 // pred_fallthru
    _
  // Predicated region
  $region14: #{encoders_forward.5} parent=0 // pred_check
    _
  $region15: #{encoders_forward.5} parent=0 // pred_check_branch
    %270 = sbr.rel (0) target = $region17
  $region16: #{encoders_forward.5} parent=0 // pred_region
    _
  $region17: #{encoders_forward.5} parent=0 // pred_fallthru
    _
  // Predicated region
  $region18: #{encoders_forward.5} parent=0 // pred_check
    _
  $region19: #{encoders_forward.5} parent=0 // pred_check_branch
    %272 = sbr.rel (0) target = $region21
  $region20: #{encoders_forward.5} parent=0 // pred_region
    _
  $region21: #{encoders_forward.5} parent=0 // pred_fallthru
    _
  // Predicated region
  $region22: #{encoders_forward.5} parent=0 // pred_check
    _
  $region23: #{encoders_forward.5} parent=0 // pred_check_branch
    %274 = sbr.rel (0) target = $region25
  $region24: #{encoders_forward.5} parent=0 // pred_region
    _
  $region25: #{encoders_forward.5} parent=0 // pred_fallthru
    _

// kernel: encoders_forward.6
$region0: #{encoders_forward.6}
  #allocation0 [shape = 'u32[]', space=smem, size = 0x4, offset = 0x4, fixed_abs, tag = 'smem constant byte address 0x4 - core index']
  #allocation1 [shape = 'u32[72,128]{1,0:T(1,128)}', space=vmem, size = 0x9000, scoped, tag = 'internal scratch']
  %s0 = inlined_call_operand.vmem [shape: f32[128,128], index: 0, kind: input, shape index: {}]
  %s1 = inlined_call_operand.vmem [shape: f32[1,128], index: 1, kind: input, shape index: {}]
  %s2 = inlined_call_operand.vmem [shape: f32[1,128], index: 2, kind: input, shape index: {}]
  %s3 = inlined_call_operand.vmem [shape: bf16[128,128], index: 3, kind: output, shape index: {}]
  %s4 = sld [smem:[#allocation0]]
  $region22: #{encoders_forward.6} parent=0
    _
  %s6 = ssub.s32 1, %s4
  %s7 = scalar_select 0, %s6, %s4
  // Predicated region
  $region2: #{encoders_forward.6} parent=0 // pred_check
    _
  $region3: #{encoders_forward.6} parent=0 // pred_check_branch
    %9 = sbr.rel (0) target = $region5
  $region4: #{encoders_forward.6} parent=0 // pred_region
    _
  $region5: #{encoders_forward.6} parent=0 // pred_fallthru
    _
  // Predicated region
  $region6: #{encoders_forward.6} parent=0 // pred_check
    _
  $region7: #{encoders_forward.6} parent=0 // pred_check_branch
    %11 = sbr.rel (0) target = $region9
  $region8: #{encoders_forward.6} parent=0 // pred_region
    _
  $region9: #{encoders_forward.6} parent=0 // pred_fallthru
    _
  // Predicated region
  $region10: #{encoders_forward.6} parent=0 // pred_check
    _
  $region11: #{encoders_forward.6} parent=0 // pred_check_branch
    %13 = sbr.rel (0) target = $region13
  $region12: #{encoders_forward.6} parent=0 // pred_region
    _
  $region13: #{encoders_forward.6} parent=0 // pred_fallthru
    _
  %v14 = vld [vmem:[%s0] sm:$0xff]
  %v15 = vld [vmem:[%s0 + $0x8] sm:$0xff]
  %v16 = vld [vmem:[%s0 + $0x10] sm:$0xff]
  %v17 = vld [vmem:[%s0 + $0x18] sm:$0xff]
  %v18 = vld [vmem:[%s0 + $0x20] sm:$0xff]
  %v19 = vld [vmem:[%s0 + $0x28] sm:$0xff]
  %v20 = vld [vmem:[%s0 + $0x30] sm:$0xff]
  %v21 = vld [vmem:[%s0 + $0x38] sm:$0xff]
  %v22 = vld [vmem:[%s0 + $0x40] sm:$0xff]
  %v23 = vld [vmem:[%s0 + $0x48] sm:$0xff]
  %v24 = vld [vmem:[%s0 + $0x50] sm:$0xff]
  %v25 = vld [vmem:[%s0 + $0x58] sm:$0xff]
  %v26 = vld [vmem:[%s0 + $0x60] sm:$0xff]
  %v27 = vld [vmem:[%s0 + $0x68] sm:$0xff]
  %v28 = vld [vmem:[%s0 + $0x70] sm:$0xff]
  %v29 = vld [vmem:[%s0 + $0x78] sm:$0xff]
  %v30 = vld [vmem:[%s1] sm:$0x1]
  %v32 = vperm.slane %v30, 0
  %v34 = vmul.f32 %v14, %v32
  %v35 = vmul.f32 %v15, %v32
  %v36 = vmul.f32 %v16, %v32
  %v37 = vmul.f32 %v17, %v32
  %v38 = vmul.f32 %v18, %v32
  %v39 = vmul.f32 %v19, %v32
  %v40 = vmul.f32 %v20, %v32
  %v41 = vmul.f32 %v21, %v32
  %v42 = vmul.f32 %v22, %v32
  %v43 = vmul.f32 %v23, %v32
  %v44 = vmul.f32 %v24, %v32
  %v45 = vmul.f32 %v25, %v32
  %v46 = vmul.f32 %v26, %v32
  %v47 = vmul.f32 %v27, %v32
  %v48 = vmul.f32 %v28, %v32
  %v49 = vmul.f32 %v29, %v32
  %v50 = vld [vmem:[%s2] sm:$0x1]
  %v52 = vperm.slane %v50, 0
  %v54 = vadd.f32 %v34, %v52
  %v55 = vadd.f32 %v35, %v52
  %v56 = vadd.f32 %v36, %v52
  %v57 = vadd.f32 %v37, %v52
  %v58 = vadd.f32 %v38, %v52
  %v59 = vadd.f32 %v39, %v52
  %v60 = vadd.f32 %v40, %v52
  %v61 = vadd.f32 %v41, %v52
  %v62 = vadd.f32 %v42, %v52
  %v63 = vadd.f32 %v43, %v52
  %v64 = vadd.f32 %v44, %v52
  %v65 = vadd.f32 %v45, %v52
  %v66 = vadd.f32 %v46, %v52
  %v67 = vadd.f32 %v47, %v52
  %v68 = vadd.f32 %v48, %v52
  %v69 = vadd.f32 %v49, %v52
  %vm70 = vcmp.gt.f32.partialorder %v54, 0.0
  %vm71 = vcmp.gt.f32.partialorder %v55, 0.0
  %vm72 = vcmp.gt.f32.partialorder %v56, 0.0
  %vm73 = vcmp.gt.f32.partialorder %v57, 0.0
  %vm74 = vcmp.gt.f32.partialorder %v58, 0.0
  %vm75 = vcmp.gt.f32.partialorder %v59, 0.0
  %vm76 = vcmp.gt.f32.partialorder %v60, 0.0
  %vm77 = vcmp.gt.f32.partialorder %v61, 0.0
  %vm78 = vcmp.gt.f32.partialorder %v62, 0.0
  %vm79 = vcmp.gt.f32.partialorder %v63, 0.0
  %vm80 = vcmp.gt.f32.partialorder %v64, 0.0
  %vm81 = vcmp.gt.f32.partialorder %v65, 0.0
  %vm82 = vcmp.gt.f32.partialorder %v66, 0.0
  %vm83 = vcmp.gt.f32.partialorder %v67, 0.0
  %vm84 = vcmp.gt.f32.partialorder %v68, 0.0
  %vm85 = vcmp.gt.f32.partialorder %v69, 0.0
  %v86 = vmul.f32 %v54, 0.2
  %v87 = vmul.f32 %v55, 0.2
  %v88 = vmul.f32 %v56, 0.2
  %v89 = vmul.f32 %v57, 0.2
  %v90 = vmul.f32 %v58, 0.2
  %v91 = vmul.f32 %v59, 0.2
  %v92 = vmul.f32 %v60, 0.2
  %v93 = vmul.f32 %v61, 0.2
  %v94 = vmul.f32 %v62, 0.2
  %v95 = vmul.f32 %v63, 0.2
  %v96 = vmul.f32 %v64, 0.2
  %v97 = vmul.f32 %v65, 0.2
  %v98 = vmul.f32 %v66, 0.2
  %v99 = vmul.f32 %v67, 0.2
  %v100 = vmul.f32 %v68, 0.2
  %v101 = vmul.f32 %v69, 0.2
  %v102 = vsel %vm70, %v54, %v86
  %v103 = vsel %vm71, %v55, %v87
  %v104 = vsel %vm72, %v56, %v88
  %v105 = vsel %vm73, %v57, %v89
  %v106 = vsel %vm74, %v58, %v90
  %v107 = vsel %vm75, %v59, %v91
  %v108 = vsel %vm76, %v60, %v92
  %v109 = vsel %vm77, %v61, %v93
  %v110 = vsel %vm78, %v62, %v94
  %v111 = vsel %vm79, %v63, %v95
  %v112 = vsel %vm80, %v64, %v96
  %v113 = vsel %vm81, %v65, %v97
  %v114 = vsel %vm82, %v66, %v98
  %v115 = vsel %vm83, %v67, %v99
  %v116 = vsel %vm84, %v68, %v100
  %v117 = vsel %vm85, %v69, %v101
  %v118 = vpack.c.bf16 %v102, %v102
  %v119 = vpack.c.bf16 %v103, %v103
  %v120 = vpack.c.bf16 %v104, %v104
  %v121 = vpack.c.bf16 %v105, %v105
  %v122 = vpack.c.bf16 %v106, %v106
  %v123 = vpack.c.bf16 %v107, %v107
  %v124 = vpack.c.bf16 %v108, %v108
  %v125 = vpack.c.bf16 %v109, %v109
  %v126 = vpack.c.bf16 %v110, %v110
  %v127 = vpack.c.bf16 %v111, %v111
  %v128 = vpack.c.bf16 %v112, %v112
  %v129 = vpack.c.bf16 %v113, %v113
  %v130 = vpack.c.bf16 %v114, %v114
  %v131 = vpack.c.bf16 %v115, %v115
  %v132 = vpack.c.bf16 %v116, %v116
  %v133 = vpack.c.bf16 %v117, %v117
  %134 = vst [vmem:[%s3] sm:$0xf] %v118
  %135 = vst [vmem:[%s3 + $0x4] sm:$0xf] %v119
  %136 = vst [vmem:[%s3 + $0x8] sm:$0xf] %v120
  %137 = vst [vmem:[%s3 + $0xc] sm:$0xf] %v121
  %138 = vst [vmem:[%s3 + $0x10] sm:$0xf] %v122
  %139 = vst [vmem:[%s3 + $0x14] sm:$0xf] %v123
  %140 = vst [vmem:[%s3 + $0x18] sm:$0xf] %v124
  %141 = vst [vmem:[%s3 + $0x1c] sm:$0xf] %v125
  %142 = vst [vmem:[%s3 + $0x20] sm:$0xf] %v126
  %143 = vst [vmem:[%s3 + $0x24] sm:$0xf] %v127
  %144 = vst [vmem:[%s3 + $0x28] sm:$0xf] %v128
  %145 = vst [vmem:[%s3 + $0x2c] sm:$0xf] %v129
  %146 = vst [vmem:[%s3 + $0x30] sm:$0xf] %v130
  %147 = vst [vmem:[%s3 + $0x34] sm:$0xf] %v131
  %148 = vst [vmem:[%s3 + $0x38] sm:$0xf] %v132
  %149 = vst [vmem:[%s3 + $0x3c] sm:$0xf] %v133
  // Predicated region
  $region14: #{encoders_forward.6} parent=0 // pred_check
    _
  $region15: #{encoders_forward.6} parent=0 // pred_check_branch
    %151 = sbr.rel (0) target = $region17
  $region16: #{encoders_forward.6} parent=0 // pred_region
    _
  $region17: #{encoders_forward.6} parent=0 // pred_fallthru
    _
  // Predicated region
  $region18: #{encoders_forward.6} parent=0 // pred_check
    _
  $region19: #{encoders_forward.6} parent=0 // pred_check_branch
    %153 = sbr.rel (0) target = $region21
  $region20: #{encoders_forward.6} parent=0 // pred_region
    _
  $region21: #{encoders_forward.6} parent=0 // pred_fallthru
    _

// kernel: encoders_forward.8
$region0: #{encoders_forward.8}
  #allocation0 [shape = 'u32[]', space=smem, size = 0x4, offset = 0x4, fixed_abs, tag = 'smem constant byte address 0x4 - core index']
  #allocation1 [shape = 'u32[72,128]{1,0:T(1,128)}', space=vmem, size = 0x9000, scoped, tag = 'internal scratch']
  %s0 = inlined_call_operand.vmem [shape: f32[32,128], index: 0, kind: input, shape index: {}]
  %s1 = inlined_call_operand.vmem [shape: f32[1,128], index: 1, kind: input, shape index: {}]
  %s2 = inlined_call_operand.vmem [shape: f32[1,128], index: 2, kind: input, shape index: {}]
  %s3 = inlined_call_operand.vmem [shape: bf16[32,128], index: 3, kind: output, shape index: {}]
  %s4 = sld [smem:[#allocation0]]
  $region22: #{encoders_forward.8} parent=0
    _
  %s6 = ssub.s32 1, %s4
  %s7 = scalar_select 0, %s6, %s4
  // Predicated region
  $region2: #{encoders_forward.8} parent=0 // pred_check
    _
  $region3: #{encoders_forward.8} parent=0 // pred_check_branch
    %9 = sbr.rel (0) target = $region5
  $region4: #{encoders_forward.8} parent=0 // pred_region
    _
  $region5: #{encoders_forward.8} parent=0 // pred_fallthru
    _
  // Predicated region
  $region6: #{encoders_forward.8} parent=0 // pred_check
    _
  $region7: #{encoders_forward.8} parent=0 // pred_check_branch
    %11 = sbr.rel (0) target = $region9
  $region8: #{encoders_forward.8} parent=0 // pred_region
    _
  $region9: #{encoders_forward.8} parent=0 // pred_fallthru
    _
  // Predicated region
  $region10: #{encoders_forward.8} parent=0 // pred_check
    _
  $region11: #{encoders_forward.8} parent=0 // pred_check_branch
    %13 = sbr.rel (0) target = $region13
  $region12: #{encoders_forward.8} parent=0 // pred_region
    _
  $region13: #{encoders_forward.8} parent=0 // pred_fallthru
    _
  %v14 = vld [vmem:[%s0] sm:$0xff]
  %v15 = vld [vmem:[%s0 + $0x8] sm:$0xff]
  %v16 = vld [vmem:[%s0 + $0x10] sm:$0xff]
  %v17 = vld [vmem:[%s0 + $0x18] sm:$0xff]
  %v18 = vld [vmem:[%s1] sm:$0x1]
  %v20 = vperm.slane %v18, 0
  %v22 = vmul.f32 %v14, %v20
  %v23 = vmul.f32 %v15, %v20
  %v24 = vmul.f32 %v16, %v20
  %v25 = vmul.f32 %v17, %v20
  %v26 = vld [vmem:[%s2] sm:$0x1]
  %v28 = vperm.slane %v26, 0
  %v30 = vadd.f32 %v22, %v28
  %v31 = vadd.f32 %v23, %v28
  %v32 = vadd.f32 %v24, %v28
  %v33 = vadd.f32 %v25, %v28
  %vm34 = vcmp.gt.f32.partialorder %v30, 0.0
  %vm35 = vcmp.gt.f32.partialorder %v31, 0.0
  %vm36 = vcmp.gt.f32.partialorder %v32, 0.0
  %vm37 = vcmp.gt.f32.partialorder %v33, 0.0
  %v38 = vmul.f32 %v30, 0.2
  %v39 = vmul.f32 %v31, 0.2
  %v40 = vmul.f32 %v32, 0.2
  %v41 = vmul.f32 %v33, 0.2
  %v42 = vsel %vm34, %v30, %v38
  %v43 = vsel %vm35, %v31, %v39
  %v44 = vsel %vm36, %v32, %v40
  %v45 = vsel %vm37, %v33, %v41
  %v46 = vpack.c.bf16 %v42, %v42
  %v47 = vpack.c.bf16 %v43, %v43
  %v48 = vpack.c.bf16 %v44, %v44
  %v49 = vpack.c.bf16 %v45, %v45
  %50 = vst [vmem:[%s3] sm:$0xf] %v46
  %51 = vst [vmem:[%s3 + $0x4] sm:$0xf] %v47
  %52 = vst [vmem:[%s3 + $0x8] sm:$0xf] %v48
  %53 = vst [vmem:[%s3 + $0xc] sm:$0xf] %v49
  // Predicated region
  $region14: #{encoders_forward.8} parent=0 // pred_check
    _
  $region15: #{encoders_forward.8} parent=0 // pred_check_branch
    %55 = sbr.rel (0) target = $region17
  $region16: #{encoders_forward.8} parent=0 // pred_region
    _
  $region17: #{encoders_forward.8} parent=0 // pred_fallthru
    _
  // Predicated region
  $region18: #{encoders_forward.8} parent=0 // pred_check
    _
  $region19: #{encoders_forward.8} parent=0 // pred_check_branch
    %57 = sbr.rel (0) target = $region21
  $region20: #{encoders_forward.8} parent=0 // pred_region
    _
  $region21: #{encoders_forward.8} parent=0 // pred_fallthru
    _

// kernel: encoders_forward.7
$region0: #{encoders_forward.7}
  #allocation0 [shape = 'u32[]', space=smem, size = 0x4, offset = 0x4, fixed_abs, tag = 'smem constant byte address 0x4 - core index']
  #allocation1 [shape = 'u32[72,128]{1,0:T(1,128)}', space=vmem, size = 0x9000, scoped, tag = 'internal scratch']
  %s0 = inlined_call_operand.vmem [shape: bf16[32,2048], index: 0, kind: input, shape index: {}]
  %s1 = inlined_call_operand.vmem [shape: bf16[2048,128], index: 1, kind: input, shape index: {}]
  %s2 = inlined_call_operand.vmem [shape: f32[32,128], index: 2, kind: output, shape index: {0}]
  %s3 = inlined_call_operand.vmem [shape: f32[1,2,128], index: 3, kind: output, shape index: {1}]
  %4 = xla_tuple %s2, %s3
  %s5 = sld [smem:[#allocation0]]
  $region26: #{encoders_forward.7} parent=0
    _
  %s7 = ssub.s32 1, %s5
  %s8 = scalar_select 0, %s7, %s5
  // Predicated region
  $region2: #{encoders_forward.7} parent=0 // pred_check
    _
  $region3: #{encoders_forward.7} parent=0 // pred_check_branch
    %10 = sbr.rel (0) target = $region5
  $region4: #{encoders_forward.7} parent=0 // pred_region
    _
  $region5: #{encoders_forward.7} parent=0 // pred_fallthru
    _
  // Predicated region
  $region6: #{encoders_forward.7} parent=0 // pred_check
    _
  $region7: #{encoders_forward.7} parent=0 // pred_check_branch
    %12 = sbr.rel (0) target = $region9
  $region8: #{encoders_forward.7} parent=0 // pred_region
    _
  $region9: #{encoders_forward.7} parent=0 // pred_fallthru
    _
  %v13 = vld [vmem:[%s0] sm:$0xff]
  %v14 = vld [vmem:[%s0 + $0x8] sm:$0xff]
  %v15 = vld [vmem:[%s0 + $0x10] sm:$0xff]
  %v16 = vld [vmem:[%s0 + $0x18] sm:$0xff]
  %v17 = vld [vmem:[%s0 + $0x20] sm:$0xff]
  %v18 = vld [vmem:[%s0 + $0x28] sm:$0xff]
  %v19 = vld [vmem:[%s0 + $0x30] sm:$0xff]
  %v20 = vld [vmem:[%s0 + $0x38] sm:$0xff]
  %v21 = vld [vmem:[%s0 + $0x40] sm:$0xff]
  %v22 = vld [vmem:[%s0 + $0x48] sm:$0xff]
  %v23 = vld [vmem:[%s0 + $0x50] sm:$0xff]
  %v24 = vld [vmem:[%s0 + $0x58] sm:$0xff]
  %v25 = vld [vmem:[%s0 + $0x60] sm:$0xff]
  %v26 = vld [vmem:[%s0 + $0x68] sm:$0xff]
  %v27 = vld [vmem:[%s0 + $0x70] sm:$0xff]
  %v28 = vld [vmem:[%s0 + $0x78] sm:$0xff]
  %v29 = vld [vmem:[%s0 + $0x80] sm:$0xff]
  %v30 = vld [vmem:[%s0 + $0x88] sm:$0xff]
  %v31 = vld [vmem:[%s0 + $0x90] sm:$0xff]
  %v32 = vld [vmem:[%s0 + $0x98] sm:$0xff]
  %v33 = vld [vmem:[%s0 + $0xa0] sm:$0xff]
  %v34 = vld [vmem:[%s0 + $0xa8] sm:$0xff]
  %v35 = vld [vmem:[%s0 + $0xb0] sm:$0xff]
  %v36 = vld [vmem:[%s0 + $0xb8] sm:$0xff]
  %v37 = vld [vmem:[%s0 + $0xc0] sm:$0xff]
  %v38 = vld [vmem:[%s0 + $0xc8] sm:$0xff]
  %v39 = vld [vmem:[%s0 + $0xd0] sm:$0xff]
  %v40 = vld [vmem:[%s0 + $0xd8] sm:$0xff]
  %v41 = vld [vmem:[%s0 + $0xe0] sm:$0xff]
  %v42 = vld [vmem:[%s0 + $0xe8] sm:$0xff]
  %v43 = vld [vmem:[%s0 + $0xf0] sm:$0xff]
  %v44 = vld [vmem:[%s0 + $0xf8] sm:$0xff]
  %v45 = vld [vmem:[%s1] sm:$0xf]
  %v46 = vld [vmem:[%s1 + $0x4] sm:$0xf]
  %v47 = vld [vmem:[%s1 + $0x8] sm:$0xf]
  %v48 = vld [vmem:[%s1 + $0xc] sm:$0xf]
  %v49 = vld [vmem:[%s1 + $0x10] sm:$0xf]
  %v50 = vld [vmem:[%s1 + $0x14] sm:$0xf]
  %v51 = vld [vmem:[%s1 + $0x18] sm:$0xf]
  %v52 = vld [vmem:[%s1 + $0x1c] sm:$0xf]
  %v53 = vld [vmem:[%s1 + $0x20] sm:$0xf]
  %v54 = vld [vmem:[%s1 + $0x24] sm:$0xf]
  %v55 = vld [vmem:[%s1 + $0x28] sm:$0xf]
  %v56 = vld [vmem:[%s1 + $0x2c] sm:$0xf]
  %v57 = vld [vmem:[%s1 + $0x30] sm:$0xf]
  %v58 = vld [vmem:[%s1 + $0x34] sm:$0xf]
  %v59 = vld [vmem:[%s1 + $0x38] sm:$0xf]
  %v60 = vld [vmem:[%s1 + $0x3c] sm:$0xf]
  %v61 = vld [vmem:[%s1 + $0x40] sm:$0xf]
  %v62 = vld [vmem:[%s1 + $0x44] sm:$0xf]
  %v63 = vld [vmem:[%s1 + $0x48] sm:$0xf]
  %v64 = vld [vmem:[%s1 + $0x4c] sm:$0xf]
  %v65 = vld [vmem:[%s1 + $0x50] sm:$0xf]
  %v66 = vld [vmem:[%s1 + $0x54] sm:$0xf]
  %v67 = vld [vmem:[%s1 + $0x58] sm:$0xf]
  %v68 = vld [vmem:[%s1 + $0x5c] sm:$0xf]
  %v69 = vld [vmem:[%s1 + $0x60] sm:$0xf]
  %v70 = vld [vmem:[%s1 + $0x64] sm:$0xf]
  %v71 = vld [vmem:[%s1 + $0x68] sm:$0xf]
  %v72 = vld [vmem:[%s1 + $0x6c] sm:$0xf]
  %v73 = vld [vmem:[%s1 + $0x70] sm:$0xf]
  %v74 = vld [vmem:[%s1 + $0x74] sm:$0xf]
  %v75 = vld [vmem:[%s1 + $0x78] sm:$0xf]
  %v76 = vld [vmem:[%s1 + $0x7c] sm:$0xf]
  %v77 = vld [vmem:[%s1 + $0x80] sm:$0xf]
  %v78 = vld [vmem:[%s1 + $0x84] sm:$0xf]
  %v79 = vld [vmem:[%s1 + $0x88] sm:$0xf]
  %v80 = vld [vmem:[%s1 + $0x8c] sm:$0xf]
  %v81 = vld [vmem:[%s1 + $0x90] sm:$0xf]
  %v82 = vld [vmem:[%s1 + $0x94] sm:$0xf]
  %v83 = vld [vmem:[%s1 + $0x98] sm:$0xf]
  %v84 = vld [vmem:[%s1 + $0x9c] sm:$0xf]
  %v85 = vld [vmem:[%s1 + $0xa0] sm:$0xf]
  %v86 = vld [vmem:[%s1 + $0xa4] sm:$0xf]
  %v87 = vld [vmem:[%s1 + $0xa8] sm:$0xf]
  %v88 = vld [vmem:[%s1 + $0xac] sm:$0xf]
  %v89 = vld [vmem:[%s1 + $0xb0] sm:$0xf]
  %v90 = vld [vmem:[%s1 + $0xb4] sm:$0xf]
  %v91 = vld [vmem:[%s1 + $0xb8] sm:$0xf]
  %v92 = vld [vmem:[%s1 + $0xbc] sm:$0xf]
  %v93 = vld [vmem:[%s1 + $0xc0] sm:$0xf]
  %v94 = vld [vmem:[%s1 + $0xc4] sm:$0xf]
  %v95 = vld [vmem:[%s1 + $0xc8] sm:$0xf]
  %v96 = vld [vmem:[%s1 + $0xcc] sm:$0xf]
  %v97 = vld [vmem:[%s1 + $0xd0] sm:$0xf]
  %v98 = vld [vmem:[%s1 + $0xd4] sm:$0xf]
  %v99 = vld [vmem:[%s1 + $0xd8] sm:$0xf]
  %v100 = vld [vmem:[%s1 + $0xdc] sm:$0xf]
  %v101 = vld [vmem:[%s1 + $0xe0] sm:$0xf]
  %v102 = vld [vmem:[%s1 + $0xe4] sm:$0xf]
  %v103 = vld [vmem:[%s1 + $0xe8] sm:$0xf]
  %v104 = vld [vmem:[%s1 + $0xec] sm:$0xf]
  %v105 = vld [vmem:[%s1 + $0xf0] sm:$0xf]
  %v106 = vld [vmem:[%s1 + $0xf4] sm:$0xf]
  %v107 = vld [vmem:[%s1 + $0xf8] sm:$0xf]
  %v108 = vld [vmem:[%s1 + $0xfc] sm:$0xf]
  %v109 = vld [vmem:[%s1 + $0x100] sm:$0xf]
  %v110 = vld [vmem:[%s1 + $0x104] sm:$0xf]
  %v111 = vld [vmem:[%s1 + $0x108] sm:$0xf]
  %v112 = vld [vmem:[%s1 + $0x10c] sm:$0xf]
  %v113 = vld [vmem:[%s1 + $0x110] sm:$0xf]
  %v114 = vld [vmem:[%s1 + $0x114] sm:$0xf]
  %v115 = vld [vmem:[%s1 + $0x118] sm:$0xf]
  %v116 = vld [vmem:[%s1 + $0x11c] sm:$0xf]
  %v117 = vld [vmem:[%s1 + $0x120] sm:$0xf]
  %v118 = vld [vmem:[%s1 + $0x124] sm:$0xf]
  %v119 = vld [vmem:[%s1 + $0x128] sm:$0xf]
  %v120 = vld [vmem:[%s1 + $0x12c] sm:$0xf]
  %v121 = vld [vmem:[%s1 + $0x130] sm:$0xf]
  %v122 = vld [vmem:[%s1 + $0x134] sm:$0xf]
  %v123 = vld [vmem:[%s1 + $0x138] sm:$0xf]
  %v124 = vld [vmem:[%s1 + $0x13c] sm:$0xf]
  %v125 = vld [vmem:[%s1 + $0x140] sm:$0xf]
  %v126 = vld [vmem:[%s1 + $0x144] sm:$0xf]
  %v127 = vld [vmem:[%s1 + $0x148] sm:$0xf]
  %v128 = vld [vmem:[%s1 + $0x14c] sm:$0xf]
  %v129 = vld [vmem:[%s1 + $0x150] sm:$0xf]
  %v130 = vld [vmem:[%s1 + $0x154] sm:$0xf]
  %v131 = vld [vmem:[%s1 + $0x158] sm:$0xf]
  %v132 = vld [vmem:[%s1 + $0x15c] sm:$0xf]
  %v133 = vld [vmem:[%s1 + $0x160] sm:$0xf]
  %v134 = vld [vmem:[%s1 + $0x164] sm:$0xf]
  %v135 = vld [vmem:[%s1 + $0x168] sm:$0xf]
  %v136 = vld [vmem:[%s1 + $0x16c] sm:$0xf]
  %v137 = vld [vmem:[%s1 + $0x170] sm:$0xf]
  %v138 = vld [vmem:[%s1 + $0x174] sm:$0xf]
  %v139 = vld [vmem:[%s1 + $0x178] sm:$0xf]
  %v140 = vld [vmem:[%s1 + $0x17c] sm:$0xf]
  %v141 = vld [vmem:[%s1 + $0x180] sm:$0xf]
  %v142 = vld [vmem:[%s1 + $0x184] sm:$0xf]
  %v143 = vld [vmem:[%s1 + $0x188] sm:$0xf]
  %v144 = vld [vmem:[%s1 + $0x18c] sm:$0xf]
  %v145 = vld [vmem:[%s1 + $0x190] sm:$0xf]
  %v146 = vld [vmem:[%s1 + $0x194] sm:$0xf]
  %v147 = vld [vmem:[%s1 + $0x198] sm:$0xf]
  %v148 = vld [vmem:[%s1 + $0x19c] sm:$0xf]
  %v149 = vld [vmem:[%s1 + $0x1a0] sm:$0xf]
  %v150 = vld [vmem:[%s1 + $0x1a4] sm:$0xf]
  %v151 = vld [vmem:[%s1 + $0x1a8] sm:$0xf]
  %v152 = vld [vmem:[%s1 + $0x1ac] sm:$0xf]
  %v153 = vld [vmem:[%s1 + $0x1b0] sm:$0xf]
  %v154 = vld [vmem:[%s1 + $0x1b4] sm:$0xf]
  %v155 = vld [vmem:[%s1 + $0x1b8] sm:$0xf]
  %v156 = vld [vmem:[%s1 + $0x1bc] sm:$0xf]
  %v157 = vld [vmem:[%s1 + $0x1c0] sm:$0xf]
  %v158 = vld [vmem:[%s1 + $0x1c4] sm:$0xf]
  %v159 = vld [vmem:[%s1 + $0x1c8] sm:$0xf]
  %v160 = vld [vmem:[%s1 + $0x1cc] sm:$0xf]
  %v161 = vld [vmem:[%s1 + $0x1d0] sm:$0xf]
  %v162 = vld [vmem:[%s1 + $0x1d4] sm:$0xf]
  %v163 = vld [vmem:[%s1 + $0x1d8] sm:$0xf]
  %v164 = vld [vmem:[%s1 + $0x1dc] sm:$0xf]
  %v165 = vld [vmem:[%s1 + $0x1e0] sm:$0xf]
  %v166 = vld [vmem:[%s1 + $0x1e4] sm:$0xf]
  %v167 = vld [vmem:[%s1 + $0x1e8] sm:$0xf]
  %v168 = vld [vmem:[%s1 + $0x1ec] sm:$0xf]
  %v169 = vld [vmem:[%s1 + $0x1f0] sm:$0xf]
  %v170 = vld [vmem:[%s1 + $0x1f4] sm:$0xf]
  %v171 = vld [vmem:[%s1 + $0x1f8] sm:$0xf]
  %v172 = vld [vmem:[%s1 + $0x1fc] sm:$0xf]
  %v173 = vld [vmem:[%s1 + $0x200] sm:$0xf]
  %v174 = vld [vmem:[%s1 + $0x204] sm:$0xf]
  %v175 = vld [vmem:[%s1 + $0x208] sm:$0xf]
  %v176 = vld [vmem:[%s1 + $0x20c] sm:$0xf]
  %v177 = vld [vmem:[%s1 + $0x210] sm:$0xf]
  %v178 = vld [vmem:[%s1 + $0x214] sm:$0xf]
  %v179 = vld [vmem:[%s1 + $0x218] sm:$0xf]
  %v180 = vld [vmem:[%s1 + $0x21c] sm:$0xf]
  %v181 = vld [vmem:[%s1 + $0x220] sm:$0xf]
  %v182 = vld [vmem:[%s1 + $0x224] sm:$0xf]
  %v183 = vld [vmem:[%s1 + $0x228] sm:$0xf]
  %v184 = vld [vmem:[%s1 + $0x22c] sm:$0xf]
  %v185 = vld [vmem:[%s1 + $0x230] sm:$0xf]
  %v186 = vld [vmem:[%s1 + $0x234] sm:$0xf]
  %v187 = vld [vmem:[%s1 + $0x238] sm:$0xf]
  %v188 = vld [vmem:[%s1 + $0x23c] sm:$0xf]
  %v189 = vld [vmem:[%s1 + $0x240] sm:$0xf]
  %v190 = vld [vmem:[%s1 + $0x244] sm:$0xf]
  %v191 = vld [vmem:[%s1 + $0x248] sm:$0xf]
  %v192 = vld [vmem:[%s1 + $0x24c] sm:$0xf]
  %v193 = vld [vmem:[%s1 + $0x250] sm:$0xf]
  %v194 = vld [vmem:[%s1 + $0x254] sm:$0xf]
  %v195 = vld [vmem:[%s1 + $0x258] sm:$0xf]
  %v196 = vld [vmem:[%s1 + $0x25c] sm:$0xf]
  %v197 = vld [vmem:[%s1 + $0x260] sm:$0xf]
  %v198 = vld [vmem:[%s1 + $0x264] sm:$0xf]
  %v199 = vld [vmem:[%s1 + $0x268] sm:$0xf]
  %v200 = vld [vmem:[%s1 + $0x26c] sm:$0xf]
  %v201 = vld [vmem:[%s1 + $0x270] sm:$0xf]
  %v202 = vld [vmem:[%s1 + $0x274] sm:$0xf]
  %v203 = vld [vmem:[%s1 + $0x278] sm:$0xf]
  %v204 = vld [vmem:[%s1 + $0x27c] sm:$0xf]
  %v205 = vld [vmem:[%s1 + $0x280] sm:$0xf]
  %v206 = vld [vmem:[%s1 + $0x284] sm:$0xf]
  %v207 = vld [vmem:[%s1 + $0x288] sm:$0xf]
  %v208 = vld [vmem:[%s1 + $0x28c] sm:$0xf]
  %v209 = vld [vmem:[%s1 + $0x290] sm:$0xf]
  %v210 = vld [vmem:[%s1 + $0x294] sm:$0xf]
  %v211 = vld [vmem:[%s1 + $0x298] sm:$0xf]
  %v212 = vld [vmem:[%s1 + $0x29c] sm:$0xf]
  %v213 = vld [vmem:[%s1 + $0x2a0] sm:$0xf]
  %v214 = vld [vmem:[%s1 + $0x2a4] sm:$0xf]
  %v215 = vld [vmem:[%s1 + $0x2a8] sm:$0xf]
  %v216 = vld [vmem:[%s1 + $0x2ac] sm:$0xf]
  %v217 = vld [vmem:[%s1 + $0x2b0] sm:$0xf]
  %v218 = vld [vmem:[%s1 + $0x2b4] sm:$0xf]
  %v219 = vld [vmem:[%s1 + $0x2b8] sm:$0xf]
  %v220 = vld [vmem:[%s1 + $0x2bc] sm:$0xf]
  %v221 = vld [vmem:[%s1 + $0x2c0] sm:$0xf]
  %v222 = vld [vmem:[%s1 + $0x2c4] sm:$0xf]
  %v223 = vld [vmem:[%s1 + $0x2c8] sm:$0xf]
  %v224 = vld [vmem:[%s1 + $0x2cc] sm:$0xf]
  %v225 = vld [vmem:[%s1 + $0x2d0] sm:$0xf]
  %v226 = vld [vmem:[%s1 + $0x2d4] sm:$0xf]
  %v227 = vld [vmem:[%s1 + $0x2d8] sm:$0xf]
  %v228 = vld [vmem:[%s1 + $0x2dc] sm:$0xf]
  %v229 = vld [vmem:[%s1 + $0x2e0] sm:$0xf]
  %v230 = vld [vmem:[%s1 + $0x2e4] sm:$0xf]
  %v231 = vld [vmem:[%s1 + $0x2e8] sm:$0xf]
  %v232 = vld [vmem:[%s1 + $0x2ec] sm:$0xf]
  %v233 = vld [vmem:[%s1 + $0x2f0] sm:$0xf]
  %v234 = vld [vmem:[%s1 + $0x2f4] sm:$0xf]
  %v235 = vld [vmem:[%s1 + $0x2f8] sm:$0xf]
  %v236 = vld [vmem:[%s1 + $0x2fc] sm:$0xf]
  %v237 = vld [vmem:[%s1 + $0x300] sm:$0xf]
  %v238 = vld [vmem:[%s1 + $0x304] sm:$0xf]
  %v239 = vld [vmem:[%s1 + $0x308] sm:$0xf]
  %v240 = vld [vmem:[%s1 + $0x30c] sm:$0xf]
  %v241 = vld [vmem:[%s1 + $0x310] sm:$0xf]
  %v242 = vld [vmem:[%s1 + $0x314] sm:$0xf]
  %v243 = vld [vmem:[%s1 + $0x318] sm:$0xf]
  %v244 = vld [vmem:[%s1 + $0x31c] sm:$0xf]
  %v245 = vld [vmem:[%s1 + $0x320] sm:$0xf]
  %v246 = vld [vmem:[%s1 + $0x324] sm:$0xf]
  %v247 = vld [vmem:[%s1 + $0x328] sm:$0xf]
  %v248 = vld [vmem:[%s1 + $0x32c] sm:$0xf]
  %v249 = vld [vmem:[%s1 + $0x330] sm:$0xf]
  %v250 = vld [vmem:[%s1 + $0x334] sm:$0xf]
  %v251 = vld [vmem:[%s1 + $0x338] sm:$0xf]
  %v252 = vld [vmem:[%s1 + $0x33c] sm:$0xf]
  %v253 = vld [vmem:[%s1 + $0x340] sm:$0xf]
  %v254 = vld [vmem:[%s1 + $0x344] sm:$0xf]
  %v255 = vld [vmem:[%s1 + $0x348] sm:$0xf]
  %v256 = vld [vmem:[%s1 + $0x34c] sm:$0xf]
  %v257 = vld [vmem:[%s1 + $0x350] sm:$0xf]
  %v258 = vld [vmem:[%s1 + $0x354] sm:$0xf]
  %v259 = vld [vmem:[%s1 + $0x358] sm:$0xf]
  %v260 = vld [vmem:[%s1 + $0x35c] sm:$0xf]
  %v261 = vld [vmem:[%s1 + $0x360] sm:$0xf]
  %v262 = vld [vmem:[%s1 + $0x364] sm:$0xf]
  %v263 = vld [vmem:[%s1 + $0x368] sm:$0xf]
  %v264 = vld [vmem:[%s1 + $0x36c] sm:$0xf]
  %v265 = vld [vmem:[%s1 + $0x370] sm:$0xf]
  %v266 = vld [vmem:[%s1 + $0x374] sm:$0xf]
  %v267 = vld [vmem:[%s1 + $0x378] sm:$0xf]
  %v268 = vld [vmem:[%s1 + $0x37c] sm:$0xf]
  %v269 = vld [vmem:[%s1 + $0x380] sm:$0xf]
  %v270 = vld [vmem:[%s1 + $0x384] sm:$0xf]
  %v271 = vld [vmem:[%s1 + $0x388] sm:$0xf]
  %v272 = vld [vmem:[%s1 + $0x38c] sm:$0xf]
  %v273 = vld [vmem:[%s1 + $0x390] sm:$0xf]
  %v274 = vld [vmem:[%s1 + $0x394] sm:$0xf]
  %v275 = vld [vmem:[%s1 + $0x398] sm:$0xf]
  %v276 = vld [vmem:[%s1 + $0x39c] sm:$0xf]
  %v277 = vld [vmem:[%s1 + $0x3a0] sm:$0xf]
  %v278 = vld [vmem:[%s1 + $0x3a4] sm:$0xf]
  %v279 = vld [vmem:[%s1 + $0x3a8] sm:$0xf]
  %v280 = vld [vmem:[%s1 + $0x3ac] sm:$0xf]
  %v281 = vld [vmem:[%s1 + $0x3b0] sm:$0xf]
  %v282 = vld [vmem:[%s1 + $0x3b4] sm:$0xf]
  %v283 = vld [vmem:[%s1 + $0x3b8] sm:$0xf]
  %v284 = vld [vmem:[%s1 + $0x3bc] sm:$0xf]
  %v285 = vld [vmem:[%s1 + $0x3c0] sm:$0xf]
  %v286 = vld [vmem:[%s1 + $0x3c4] sm:$0xf]
  %v287 = vld [vmem:[%s1 + $0x3c8] sm:$0xf]
  %v288 = vld [vmem:[%s1 + $0x3cc] sm:$0xf]
  %v289 = vld [vmem:[%s1 + $0x3d0] sm:$0xf]
  %v290 = vld [vmem:[%s1 + $0x3d4] sm:$0xf]
  %v291 = vld [vmem:[%s1 + $0x3d8] sm:$0xf]
  %v292 = vld [vmem:[%s1 + $0x3dc] sm:$0xf]
  %v293 = vld [vmem:[%s1 + $0x3e0] sm:$0xf]
  %v294 = vld [vmem:[%s1 + $0x3e4] sm:$0xf]
  %v295 = vld [vmem:[%s1 + $0x3e8] sm:$0xf]
  %v296 = vld [vmem:[%s1 + $0x3ec] sm:$0xf]
  %v297 = vld [vmem:[%s1 + $0x3f0] sm:$0xf]
  %v298 = vld [vmem:[%s1 + $0x3f4] sm:$0xf]
  %v299 = vld [vmem:[%s1 + $0x3f8] sm:$0xf]
  %v300 = vld [vmem:[%s1 + $0x3fc] sm:$0xf]
  %v333 = vunpack.c.l.b16 %v13
  %v334 = vunpack.c.h.b16 %v13
  %v335 = vunpack.c.l.b16 %v14
  %v336 = vunpack.c.h.b16 %v14
  %v337 = vunpack.c.l.b16 %v15
  %v338 = vunpack.c.h.b16 %v15
  %v339 = vunpack.c.l.b16 %v16
  %v340 = vunpack.c.h.b16 %v16
  %v341 = vunpack.c.l.b16 %v17
  %v342 = vunpack.c.h.b16 %v17
  %v343 = vunpack.c.l.b16 %v18
  %v344 = vunpack.c.h.b16 %v18
  %v345 = vunpack.c.l.b16 %v19
  %v346 = vunpack.c.h.b16 %v19
  %v347 = vunpack.c.l.b16 %v20
  %v348 = vunpack.c.h.b16 %v20
  %v349 = vunpack.c.l.b16 %v21
  %v350 = vunpack.c.h.b16 %v21
  %v351 = vunpack.c.l.b16 %v22
  %v352 = vunpack.c.h.b16 %v22
  %v353 = vunpack.c.l.b16 %v23
  %v354 = vunpack.c.h.b16 %v23
  %v355 = vunpack.c.l.b16 %v24
  %v356 = vunpack.c.h.b16 %v24
  %v357 = vunpack.c.l.b16 %v25
  %v358 = vunpack.c.h.b16 %v25
  %v359 = vunpack.c.l.b16 %v26
  %v360 = vunpack.c.h.b16 %v26
  %v361 = vunpack.c.l.b16 %v27
  %v362 = vunpack.c.h.b16 %v27
  %v363 = vunpack.c.l.b16 %v28
  %v364 = vunpack.c.h.b16 %v28
  %v365 = vunpack.c.l.b16 %v29
  %v366 = vunpack.c.h.b16 %v29
  %v367 = vunpack.c.l.b16 %v30
  %v368 = vunpack.c.h.b16 %v30
  %v369 = vunpack.c.l.b16 %v31
  %v370 = vunpack.c.h.b16 %v31
  %v371 = vunpack.c.l.b16 %v32
  %v372 = vunpack.c.h.b16 %v32
  %v373 = vunpack.c.l.b16 %v33
  %v374 = vunpack.c.h.b16 %v33
  %v375 = vunpack.c.l.b16 %v34
  %v376 = vunpack.c.h.b16 %v34
  %v377 = vunpack.c.l.b16 %v35
  %v378 = vunpack.c.h.b16 %v35
  %v379 = vunpack.c.l.b16 %v36
  %v380 = vunpack.c.h.b16 %v36
  %v381 = vunpack.c.l.b16 %v37
  %v382 = vunpack.c.h.b16 %v37
  %v383 = vunpack.c.l.b16 %v38
  %v384 = vunpack.c.h.b16 %v38
  %v385 = vunpack.c.l.b16 %v39
  %v386 = vunpack.c.h.b16 %v39
  %v387 = vunpack.c.l.b16 %v40
  %v388 = vunpack.c.h.b16 %v40
  %v389 = vunpack.c.l.b16 %v41
  %v390 = vunpack.c.h.b16 %v41
  %v391 = vunpack.c.l.b16 %v42
  %v392 = vunpack.c.h.b16 %v42
  %v393 = vunpack.c.l.b16 %v43
  %v394 = vunpack.c.h.b16 %v43
  %v395 = vunpack.c.l.b16 %v44
  %v396 = vunpack.c.h.b16 %v44
  %v397 = vpack.c.b16 %v349, %v333
  %v398 = vpack.c.b16 %v350, %v334
  %v399 = vpack.c.b16 %v351, %v335
  %v400 = vpack.c.b16 %v352, %v336
  %v401 = vpack.c.b16 %v353, %v337
  %v402 = vpack.c.b16 %v354, %v338
  %v403 = vpack.c.b16 %v355, %v339
  %v404 = vpack.c.b16 %v356, %v340
  %v405 = vpack.c.b16 %v357, %v341
  %v406 = vpack.c.b16 %v358, %v342
  %v407 = vpack.c.b16 %v359, %v343
  %v408 = vpack.c.b16 %v360, %v344
  %v409 = vpack.c.b16 %v361, %v345
  %v410 = vpack.c.b16 %v362, %v346
  %v411 = vpack.c.b16 %v363, %v347
  %v412 = vpack.c.b16 %v364, %v348
  %v413 = vpack.c.b16 %v381, %v365
  %v414 = vpack.c.b16 %v382, %v366
  %v415 = vpack.c.b16 %v383, %v367
  %v416 = vpack.c.b16 %v384, %v368
  %v417 = vpack.c.b16 %v385, %v369
  %v418 = vpack.c.b16 %v386, %v370
  %v419 = vpack.c.b16 %v387, %v371
  %v420 = vpack.c.b16 %v388, %v372
  %v421 = vpack.c.b16 %v389, %v373
  %v422 = vpack.c.b16 %v390, %v374
  %v423 = vpack.c.b16 %v391, %v375
  %v424 = vpack.c.b16 %v392, %v376
  %v425 = vpack.c.b16 %v393, %v377
  %v426 = vpack.c.b16 %v394, %v378
  %v427 = vpack.c.b16 %v395, %v379
  %v428 = vpack.c.b16 %v396, %v380
  %v717 = vunpack.c.l.b16 %v45
  %v718 = vunpack.c.l.b16 %v46
  %v719 = vunpack.c.l.b16 %v47
  %v720 = vunpack.c.l.b16 %v48
  %v721 = vunpack.c.l.b16 %v49
  %v722 = vunpack.c.l.b16 %v50
  %v723 = vunpack.c.l.b16 %v51
  %v724 = vunpack.c.l.b16 %v52
  %v725 = vunpack.c.l.b16 %v53
  %v726 = vunpack.c.l.b16 %v54
  %v727 = vunpack.c.l.b16 %v55
  %v728 = vunpack.c.l.b16 %v56
  %v729 = vunpack.c.l.b16 %v57
  %v730 = vunpack.c.l.b16 %v58
  %v731 = vunpack.c.l.b16 %v59
  %v732 = vunpack.c.l.b16 %v60
  %v733 = vunpack.c.l.b16 %v61
  %v734 = vunpack.c.l.b16 %v62
  %v735 = vunpack.c.l.b16 %v63
  %v736 = vunpack.c.l.b16 %v64
  %v737 = vunpack.c.l.b16 %v65
  %v738 = vunpack.c.l.b16 %v66
  %v739 = vunpack.c.l.b16 %v67
  %v740 = vunpack.c.l.b16 %v68
  %v741 = vunpack.c.l.b16 %v69
  %v742 = vunpack.c.l.b16 %v70
  %v743 = vunpack.c.l.b16 %v71
  %v744 = vunpack.c.l.b16 %v72
  %v745 = vunpack.c.l.b16 %v73
  %v746 = vunpack.c.l.b16 %v74
  %v747 = vunpack.c.l.b16 %v75
  %v748 = vunpack.c.l.b16 %v76
  %v749 = vunpack.c.l.b16 %v77
  %v750 = vunpack.c.l.b16 %v78
  %v751 = vunpack.c.l.b16 %v79
  %v752 = vunpack.c.l.b16 %v80
  %v753 = vunpack.c.l.b16 %v81
  %v754 = vunpack.c.l.b16 %v82
  %v755 = vunpack.c.l.b16 %v83
  %v756 = vunpack.c.l.b16 %v84
  %v757 = vunpack.c.l.b16 %v85
  %v758 = vunpack.c.l.b16 %v86
  %v759 = vunpack.c.l.b16 %v87
  %v760 = vunpack.c.l.b16 %v88
  %v761 = vunpack.c.l.b16 %v89
  %v762 = vunpack.c.l.b16 %v90
  %v763 = vunpack.c.l.b16 %v91
  %v764 = vunpack.c.l.b16 %v92
  %v765 = vunpack.c.l.b16 %v93
  %v766 = vunpack.c.l.b16 %v94
  %v767 = vunpack.c.l.b16 %v95
  %v768 = vunpack.c.l.b16 %v96
  %v769 = vunpack.c.l.b16 %v97
  %v770 = vunpack.c.l.b16 %v98
  %v771 = vunpack.c.l.b16 %v99
  %v772 = vunpack.c.l.b16 %v100
  %v773 = vunpack.c.l.b16 %v101
  %v774 = vunpack.c.l.b16 %v102
  %v775 = vunpack.c.l.b16 %v103
  %v776 = vunpack.c.l.b16 %v104
  %v777 = vunpack.c.l.b16 %v105
  %v778 = vunpack.c.l.b16 %v106
  %v779 = vunpack.c.l.b16 %v107
  %v780 = vunpack.c.l.b16 %v108
  %v781 = vunpack.c.l.b16 %v109
  %v782 = vunpack.c.l.b16 %v110
  %v783 = vunpack.c.l.b16 %v111
  %v784 = vunpack.c.l.b16 %v112
  %v785 = vunpack.c.l.b16 %v113
  %v786 = vunpack.c.l.b16 %v114
  %v787 = vunpack.c.l.b16 %v115
  %v788 = vunpack.c.l.b16 %v116
  %v789 = vunpack.c.l.b16 %v117
  %v790 = vunpack.c.l.b16 %v118
  %v791 = vunpack.c.l.b16 %v119
  %v792 = vunpack.c.l.b16 %v120
  %v793 = vunpack.c.l.b16 %v121
  %v794 = vunpack.c.l.b16 %v122
  %v795 = vunpack.c.l.b16 %v123
  %v796 = vunpack.c.l.b16 %v124
  %v797 = vunpack.c.l.b16 %v125
  %v798 = vunpack.c.l.b16 %v126
  %v799 = vunpack.c.l.b16 %v127
  %v800 = vunpack.c.l.b16 %v128
  %v801 = vunpack.c.l.b16 %v129
  %v802 = vunpack.c.l.b16 %v130
  %v803 = vunpack.c.l.b16 %v131
  %v804 = vunpack.c.l.b16 %v132
  %v805 = vunpack.c.l.b16 %v133
  %v806 = vunpack.c.l.b16 %v134
  %v807 = vunpack.c.l.b16 %v135
  %v808 = vunpack.c.l.b16 %v136
  %v809 = vunpack.c.l.b16 %v137
  %v810 = vunpack.c.l.b16 %v138
  %v811 = vunpack.c.l.b16 %v139
  %v812 = vunpack.c.l.b16 %v140
  %v813 = vunpack.c.l.b16 %v141
  %v814 = vunpack.c.l.b16 %v142
  %v815 = vunpack.c.l.b16 %v143
  %v816 = vunpack.c.l.b16 %v144
  %v817 = vunpack.c.l.b16 %v145
  %v818 = vunpack.c.l.b16 %v146
  %v819 = vunpack.c.l.b16 %v147
  %v820 = vunpack.c.l.b16 %v148
  %v821 = vunpack.c.l.b16 %v149
  %v822 = vunpack.c.l.b16 %v150
  %v823 = vunpack.c.l.b16 %v151
  %v824 = vunpack.c.l.b16 %v152
  %v825 = vunpack.c.l.b16 %v153
  %v826 = vunpack.c.l.b16 %v154
  %v827 = vunpack.c.l.b16 %v155
  %v828 = vunpack.c.l.b16 %v156
  %v829 = vunpack.c.l.b16 %v157
  %v830 = vunpack.c.l.b16 %v158
  %v831 = vunpack.c.l.b16 %v159
  %v832 = vunpack.c.l.b16 %v160
  %v833 = vunpack.c.l.b16 %v161
  %v834 = vunpack.c.l.b16 %v162
  %v835 = vunpack.c.l.b16 %v163
  %v836 = vunpack.c.l.b16 %v164
  %v837 = vunpack.c.l.b16 %v165
  %v838 = vunpack.c.l.b16 %v166
  %v839 = vunpack.c.l.b16 %v167
  %v840 = vunpack.c.l.b16 %v168
  %v841 = vunpack.c.l.b16 %v169
  %v842 = vunpack.c.l.b16 %v170
  %v843 = vunpack.c.l.b16 %v171
  %v844 = vunpack.c.l.b16 %v172
  %v845 = vunpack.c.l.b16 %v173
  %v846 = vunpack.c.l.b16 %v174
  %v847 = vunpack.c.l.b16 %v175
  %v848 = vunpack.c.l.b16 %v176
  %v849 = vunpack.c.l.b16 %v177
  %v850 = vunpack.c.l.b16 %v178
  %v851 = vunpack.c.l.b16 %v179
  %v852 = vunpack.c.l.b16 %v180
  %v853 = vunpack.c.l.b16 %v181
  %v854 = vunpack.c.l.b16 %v182
  %v855 = vunpack.c.l.b16 %v183
  %v856 = vunpack.c.l.b16 %v184
  %v857 = vunpack.c.l.b16 %v185
  %v858 = vunpack.c.l.b16 %v186
  %v859 = vunpack.c.l.b16 %v187
  %v860 = vunpack.c.l.b16 %v188
  %v861 = vunpack.c.l.b16 %v189
  %v862 = vunpack.c.l.b16 %v190
  %v863 = vunpack.c.l.b16 %v191
  %v864 = vunpack.c.l.b16 %v192
  %v865 = vunpack.c.l.b16 %v193
  %v866 = vunpack.c.l.b16 %v194
  %v867 = vunpack.c.l.b16 %v195
  %v868 = vunpack.c.l.b16 %v196
  %v869 = vunpack.c.l.b16 %v197
  %v870 = vunpack.c.l.b16 %v198
  %v871 = vunpack.c.l.b16 %v199
  %v872 = vunpack.c.l.b16 %v200
  %v873 = vunpack.c.l.b16 %v201
  %v874 = vunpack.c.l.b16 %v202
  %v875 = vunpack.c.l.b16 %v203
  %v876 = vunpack.c.l.b16 %v204
  %v877 = vunpack.c.l.b16 %v205
  %v878 = vunpack.c.l.b16 %v206
  %v879 = vunpack.c.l.b16 %v207
  %v880 = vunpack.c.l.b16 %v208
  %v881 = vunpack.c.l.b16 %v209
  %v882 = vunpack.c.l.b16 %v210
  %v883 = vunpack.c.l.b16 %v211
  %v884 = vunpack.c.l.b16 %v212
  %v885 = vunpack.c.l.b16 %v213
  %v886 = vunpack.c.l.b16 %v214
  %v887 = vunpack.c.l.b16 %v215
  %v888 = vunpack.c.l.b16 %v216
  %v889 = vunpack.c.l.b16 %v217
  %v890 = vunpack.c.l.b16 %v218
  %v891 = vunpack.c.l.b16 %v219
  %v892 = vunpack.c.l.b16 %v220
  %v893 = vunpack.c.l.b16 %v221
  %v894 = vunpack.c.l.b16 %v222
  %v895 = vunpack.c.l.b16 %v223
  %v896 = vunpack.c.l.b16 %v224
  %v897 = vunpack.c.l.b16 %v225
  %v898 = vunpack.c.l.b16 %v226
  %v899 = vunpack.c.l.b16 %v227
  %v900 = vunpack.c.l.b16 %v228
  %v901 = vunpack.c.l.b16 %v229
  %v902 = vunpack.c.l.b16 %v230
  %v903 = vunpack.c.l.b16 %v231
  %v904 = vunpack.c.l.b16 %v232
  %v905 = vunpack.c.l.b16 %v233
  %v906 = vunpack.c.l.b16 %v234
  %v907 = vunpack.c.l.b16 %v235
  %v908 = vunpack.c.l.b16 %v236
  %v909 = vunpack.c.l.b16 %v237
  %v910 = vunpack.c.l.b16 %v238
  %v911 = vunpack.c.l.b16 %v239
  %v912 = vunpack.c.l.b16 %v240
  %v913 = vunpack.c.l.b16 %v241
  %v914 = vunpack.c.l.b16 %v242
  %v915 = vunpack.c.l.b16 %v243
  %v916 = vunpack.c.l.b16 %v244
  %v917 = vunpack.c.l.b16 %v245
  %v918 = vunpack.c.l.b16 %v246
  %v919 = vunpack.c.l.b16 %v247
  %v920 = vunpack.c.l.b16 %v248
  %v921 = vunpack.c.l.b16 %v249
  %v922 = vunpack.c.l.b16 %v250
  %v923 = vunpack.c.l.b16 %v251
  %v924 = vunpack.c.l.b16 %v252
  %v925 = vunpack.c.l.b16 %v253
  %v926 = vunpack.c.l.b16 %v254
  %v927 = vunpack.c.l.b16 %v255
  %v928 = vunpack.c.l.b16 %v256
  %v929 = vunpack.c.l.b16 %v257
  %v930 = vunpack.c.l.b16 %v258
  %v931 = vunpack.c.l.b16 %v259
  %v932 = vunpack.c.l.b16 %v260
  %v933 = vunpack.c.l.b16 %v261
  %v934 = vunpack.c.l.b16 %v262
  %v935 = vunpack.c.l.b16 %v263
  %v936 = vunpack.c.l.b16 %v264
  %v937 = vunpack.c.l.b16 %v265
  %v938 = vunpack.c.l.b16 %v266
  %v939 = vunpack.c.l.b16 %v267
  %v940 = vunpack.c.l.b16 %v268
  %v941 = vunpack.c.l.b16 %v269
  %v942 = vunpack.c.l.b16 %v270
  %v943 = vunpack.c.l.b16 %v271
  %v944 = vunpack.c.l.b16 %v272
  %v945 = vunpack.c.l.b16 %v273
  %v946 = vunpack.c.l.b16 %v274
  %v947 = vunpack.c.l.b16 %v275
  %v948 = vunpack.c.l.b16 %v276
  %v949 = vunpack.c.l.b16 %v277
  %v950 = vunpack.c.l.b16 %v278
  %v951 = vunpack.c.l.b16 %v279
  %v952 = vunpack.c.l.b16 %v280
  %v953 = vunpack.c.l.b16 %v281
  %v954 = vunpack.c.l.b16 %v282
  %v955 = vunpack.c.l.b16 %v283
  %v956 = vunpack.c.l.b16 %v284
  %v957 = vunpack.c.l.b16 %v285
  %v958 = vunpack.c.l.b16 %v286
  %v959 = vunpack.c.l.b16 %v287
  %v960 = vunpack.c.l.b16 %v288
  %v961 = vunpack.c.l.b16 %v289
  %v962 = vunpack.c.l.b16 %v290
  %v963 = vunpack.c.l.b16 %v291
  %v964 = vunpack.c.l.b16 %v292
  %v965 = vunpack.c.l.b16 %v293
  %v966 = vunpack.c.l.b16 %v294
  %v967 = vunpack.c.l.b16 %v295
  %v968 = vunpack.c.l.b16 %v296
  %v969 = vunpack.c.l.b16 %v297
  %v970 = vunpack.c.l.b16 %v298
  %v971 = vunpack.c.l.b16 %v299
  %v972 = vunpack.c.l.b16 %v300
  %v973 = vpack.c.b16 %v718, %v717
  %v974 = vpack.c.b16 %v720, %v719
  %v975 = vpack.c.b16 %v722, %v721
  %v976 = vpack.c.b16 %v724, %v723
  %v977 = vpack.c.b16 %v726, %v725
  %v978 = vpack.c.b16 %v728, %v727
  %v979 = vpack.c.b16 %v730, %v729
  %v980 = vpack.c.b16 %v732, %v731
  %v981 = vpack.c.b16 %v734, %v733
  %v982 = vpack.c.b16 %v736, %v735
  %v983 = vpack.c.b16 %v738, %v737
  %v984 = vpack.c.b16 %v740, %v739
  %v985 = vpack.c.b16 %v742, %v741
  %v986 = vpack.c.b16 %v744, %v743
  %v987 = vpack.c.b16 %v746, %v745
  %v988 = vpack.c.b16 %v748, %v747
  %v989 = vpack.c.b16 %v750, %v749
  %v990 = vpack.c.b16 %v752, %v751
  %v991 = vpack.c.b16 %v754, %v753
  %v992 = vpack.c.b16 %v756, %v755
  %v993 = vpack.c.b16 %v758, %v757
  %v994 = vpack.c.b16 %v760, %v759
  %v995 = vpack.c.b16 %v762, %v761
  %v996 = vpack.c.b16 %v764, %v763
  %v997 = vpack.c.b16 %v766, %v765
  %v998 = vpack.c.b16 %v768, %v767
  %v999 = vpack.c.b16 %v770, %v769
  %v1000 = vpack.c.b16 %v772, %v771
  %v1001 = vpack.c.b16 %v774, %v773
  %v1002 = vpack.c.b16 %v776, %v775
  %v1003 = vpack.c.b16 %v778, %v777
  %v1004 = vpack.c.b16 %v780, %v779
  %v1005 = vpack.c.b16 %v782, %v781
  %v1006 = vpack.c.b16 %v784, %v783
  %v1007 = vpack.c.b16 %v786, %v785
  %v1008 = vpack.c.b16 %v788, %v787
  %v1009 = vpack.c.b16 %v790, %v789
  %v1010 = vpack.c.b16 %v792, %v791
  %v1011 = vpack.c.b16 %v794, %v793
  %v1012 = vpack.c.b16 %v796, %v795
  %v1013 = vpack.c.b16 %v798, %v797
  %v1014 = vpack.c.b16 %v800, %v799
  %v1015 = vpack.c.b16 %v802, %v801
  %v1016 = vpack.c.b16 %v804, %v803
  %v1017 = vpack.c.b16 %v806, %v805
  %v1018 = vpack.c.b16 %v808, %v807
  %v1019 = vpack.c.b16 %v810, %v809
  %v1020 = vpack.c.b16 %v812, %v811
  %v1021 = vpack.c.b16 %v814, %v813
  %v1022 = vpack.c.b16 %v816, %v815
  %v1023 = vpack.c.b16 %v818, %v817
  %v1024 = vpack.c.b16 %v820, %v819
  %v1025 = vpack.c.b16 %v822, %v821
  %v1026 = vpack.c.b16 %v824, %v823
  %v1027 = vpack.c.b16 %v826, %v825
  %v1028 = vpack.c.b16 %v828, %v827
  %v1029 = vpack.c.b16 %v830, %v829
  %v1030 = vpack.c.b16 %v832, %v831
  %v1031 = vpack.c.b16 %v834, %v833
  %v1032 = vpack.c.b16 %v836, %v835
  %v1033 = vpack.c.b16 %v838, %v837
  %v1034 = vpack.c.b16 %v840, %v839
  %v1035 = vpack.c.b16 %v842, %v841
  %v1036 = vpack.c.b16 %v844, %v843
  %v1037 = vpack.c.b16 %v846, %v845
  %v1038 = vpack.c.b16 %v848, %v847
  %v1039 = vpack.c.b16 %v850, %v849
  %v1040 = vpack.c.b16 %v852, %v851
  %v1041 = vpack.c.b16 %v854, %v853
  %v1042 = vpack.c.b16 %v856, %v855
  %v1043 = vpack.c.b16 %v858, %v857
  %v1044 = vpack.c.b16 %v860, %v859
  %v1045 = vpack.c.b16 %v862, %v861
  %v1046 = vpack.c.b16 %v864, %v863
  %v1047 = vpack.c.b16 %v866, %v865
  %v1048 = vpack.c.b16 %v868, %v867
  %v1049 = vpack.c.b16 %v870, %v869
  %v1050 = vpack.c.b16 %v872, %v871
  %v1051 = vpack.c.b16 %v874, %v873
  %v1052 = vpack.c.b16 %v876, %v875
  %v1053 = vpack.c.b16 %v878, %v877
  %v1054 = vpack.c.b16 %v880, %v879
  %v1055 = vpack.c.b16 %v882, %v881
  %v1056 = vpack.c.b16 %v884, %v883
  %v1057 = vpack.c.b16 %v886, %v885
  %v1058 = vpack.c.b16 %v888, %v887
  %v1059 = vpack.c.b16 %v890, %v889
  %v1060 = vpack.c.b16 %v892, %v891
  %v1061 = vpack.c.b16 %v894, %v893
  %v1062 = vpack.c.b16 %v896, %v895
  %v1063 = vpack.c.b16 %v898, %v897
  %v1064 = vpack.c.b16 %v900, %v899
  %v1065 = vpack.c.b16 %v902, %v901
  %v1066 = vpack.c.b16 %v904, %v903
  %v1067 = vpack.c.b16 %v906, %v905
  %v1068 = vpack.c.b16 %v908, %v907
  %v1069 = vpack.c.b16 %v910, %v909
  %v1070 = vpack.c.b16 %v912, %v911
  %v1071 = vpack.c.b16 %v914, %v913
  %v1072 = vpack.c.b16 %v916, %v915
  %v1073 = vpack.c.b16 %v918, %v917
  %v1074 = vpack.c.b16 %v920, %v919
  %v1075 = vpack.c.b16 %v922, %v921
  %v1076 = vpack.c.b16 %v924, %v923
  %v1077 = vpack.c.b16 %v926, %v925
  %v1078 = vpack.c.b16 %v928, %v927
  %v1079 = vpack.c.b16 %v930, %v929
  %v1080 = vpack.c.b16 %v932, %v931
  %v1081 = vpack.c.b16 %v934, %v933
  %v1082 = vpack.c.b16 %v936, %v935
  %v1083 = vpack.c.b16 %v938, %v937
  %v1084 = vpack.c.b16 %v940, %v939
  %v1085 = vpack.c.b16 %v942, %v941
  %v1086 = vpack.c.b16 %v944, %v943
  %v1087 = vpack.c.b16 %v946, %v945
  %v1088 = vpack.c.b16 %v948, %v947
  %v1089 = vpack.c.b16 %v950, %v949
  %v1090 = vpack.c.b16 %v952, %v951
  %v1091 = vpack.c.b16 %v954, %v953
  %v1092 = vpack.c.b16 %v956, %v955
  %v1093 = vpack.c.b16 %v958, %v957
  %v1094 = vpack.c.b16 %v960, %v959
  %v1095 = vpack.c.b16 %v962, %v961
  %v1096 = vpack.c.b16 %v964, %v963
  %v1097 = vpack.c.b16 %v966, %v965
  %v1098 = vpack.c.b16 %v968, %v967
  %v1099 = vpack.c.b16 %v970, %v969
  %v1100 = vpack.c.b16 %v972, %v971
  %1229 = vmatpush.bf16.msra.mxu0 %v980
  %1230 = vmatpush.bf16.msra.mxu0 %v979
  %1231 = vmatpush.bf16.msra.mxu0 %v978
  %1232 = vmatpush.bf16.msra.mxu0 %v977
  %1233 = vmatpush.bf16.msra.mxu0 %v976
  %1234 = vmatpush.bf16.msra.mxu0 %v975
  %1235 = vmatpush.bf16.msra.mxu0 %v974
  %1236 = vmatpush.bf16.msra.mxu0 %v973
  %1237 = vmatmul.bf16.gmra.mxu0 %v397
  %v1238 = vpop.f32.mrf.mxu0
  %v1239 = vadd.f32 0.0, %v1238
  %v1240 = vpop.f32.mrf.mxu0
  %v1241 = vadd.f32 0.0, %v1240
  %1242 = vmatmul.bf16.gmra.mxu0 %v413
  %v1243 = vpop.f32.mrf.mxu0
  %v1244 = vadd.f32 0.0, %v1243
  %v1245 = vpop.f32.mrf.mxu0
  %v1246 = vadd.f32 0.0, %v1245
  %1247 = vdwg.mxu0
  %1248 = vmatpush.bf16.msra.mxu0 %v988
  %1249 = vmatpush.bf16.msra.mxu0 %v987
  %1250 = vmatpush.bf16.msra.mxu0 %v986
  %1251 = vmatpush.bf16.msra.mxu0 %v985
  %1252 = vmatpush.bf16.msra.mxu0 %v984
  %1253 = vmatpush.bf16.msra.mxu0 %v983
  %1254 = vmatpush.bf16.msra.mxu0 %v982
  %1255 = vmatpush.bf16.msra.mxu0 %v981
  %1256 = vmatmul.bf16.gmra.mxu0 %v398
  %v1257 = vpop.f32.mrf.mxu0
  %v1258 = vadd.f32 %v1239, %v1257
  %v1259 = vpop.f32.mrf.mxu0
  %v1260 = vadd.f32 %v1241, %v1259
  %1261 = vmatmul.bf16.gmra.mxu0 %v414
  %v1262 = vpop.f32.mrf.mxu0
  %v1263 = vadd.f32 %v1244, %v1262
  %v1264 = vpop.f32.mrf.mxu0
  %v1265 = vadd.f32 %v1246, %v1264
  %1266 = vdwg.mxu0
  %1267 = vmatpush.bf16.msra.mxu0 %v996
  %1268 = vmatpush.bf16.msra.mxu0 %v995
  %1269 = vmatpush.bf16.msra.mxu0 %v994
  %1270 = vmatpush.bf16.msra.mxu0 %v993
  %1271 = vmatpush.bf16.msra.mxu0 %v992
  %1272 = vmatpush.bf16.msra.mxu0 %v991
  %1273 = vmatpush.bf16.msra.mxu0 %v990
  %1274 = vmatpush.bf16.msra.mxu0 %v989
  %1275 = vmatmul.bf16.gmra.mxu0 %v399
  %v1276 = vpop.f32.mrf.mxu0
  %v1277 = vadd.f32 %v1258, %v1276
  %v1278 = vpop.f32.mrf.mxu0
  %v1279 = vadd.f32 %v1260, %v1278
  %1280 = vmatmul.bf16.gmra.mxu0 %v415
  %v1281 = vpop.f32.mrf.mxu0
  %v1282 = vadd.f32 %v1263, %v1281
  %v1283 = vpop.f32.mrf.mxu0
  %v1284 = vadd.f32 %v1265, %v1283
  %1285 = vdwg.mxu0
  %1286 = vmatpush.bf16.msra.mxu0 %v1004
  %1287 = vmatpush.bf16.msra.mxu0 %v1003
  %1288 = vmatpush.bf16.msra.mxu0 %v1002
  %1289 = vmatpush.bf16.msra.mxu0 %v1001
  %1290 = vmatpush.bf16.msra.mxu0 %v1000
  %1291 = vmatpush.bf16.msra.mxu0 %v999
  %1292 = vmatpush.bf16.msra.mxu0 %v998
  %1293 = vmatpush.bf16.msra.mxu0 %v997
  %1294 = vmatmul.bf16.gmra.mxu0 %v400
  %v1295 = vpop.f32.mrf.mxu0
  %v1296 = vadd.f32 %v1277, %v1295
  %v1297 = vpop.f32.mrf.mxu0
  %v1298 = vadd.f32 %v1279, %v1297
  %1299 = vmatmul.bf16.gmra.mxu0 %v416
  %v1300 = vpop.f32.mrf.mxu0
  %v1301 = vadd.f32 %v1282, %v1300
  %v1302 = vpop.f32.mrf.mxu0
  %v1303 = vadd.f32 %v1284, %v1302
  %1304 = vdwg.mxu0
  %1305 = vmatpush.bf16.msra.mxu0 %v1012
  %1306 = vmatpush.bf16.msra.mxu0 %v1011
  %1307 = vmatpush.bf16.msra.mxu0 %v1010
  %1308 = vmatpush.bf16.msra.mxu0 %v1009
  %1309 = vmatpush.bf16.msra.mxu0 %v1008
  %1310 = vmatpush.bf16.msra.mxu0 %v1007
  %1311 = vmatpush.bf16.msra.mxu0 %v1006
  %1312 = vmatpush.bf16.msra.mxu0 %v1005
  %1313 = vmatmul.bf16.gmra.mxu0 %v401
  %v1314 = vpop.f32.mrf.mxu0
  %v1315 = vadd.f32 %v1296, %v1314
  %v1316 = vpop.f32.mrf.mxu0
  %v1317 = vadd.f32 %v1298, %v1316
  %1318 = vmatmul.bf16.gmra.mxu0 %v417
  %v1319 = vpop.f32.mrf.mxu0
  %v1320 = vadd.f32 %v1301, %v1319
  %v1321 = vpop.f32.mrf.mxu0
  %v1322 = vadd.f32 %v1303, %v1321
  %1323 = vdwg.mxu0
  %1324 = vmatpush.bf16.msra.mxu0 %v1020
  %1325 = vmatpush.bf16.msra.mxu0 %v1019
  %1326 = vmatpush.bf16.msra.mxu0 %v1018
  %1327 = vmatpush.bf16.msra.mxu0 %v1017
  %1328 = vmatpush.bf16.msra.mxu0 %v1016
  %1329 = vmatpush.bf16.msra.mxu0 %v1015
  %1330 = vmatpush.bf16.msra.mxu0 %v1014
  %1331 = vmatpush.bf16.msra.mxu0 %v1013
  %1332 = vmatmul.bf16.gmra.mxu0 %v402
  %v1333 = vpop.f32.mrf.mxu0
  %v1334 = vadd.f32 %v1315, %v1333
  %v1335 = vpop.f32.mrf.mxu0
  %v1336 = vadd.f32 %v1317, %v1335
  %1337 = vmatmul.bf16.gmra.mxu0 %v418
  %v1338 = vpop.f32.mrf.mxu0
  %v1339 = vadd.f32 %v1320, %v1338
  %v1340 = vpop.f32.mrf.mxu0
  %v1341 = vadd.f32 %v1322, %v1340
  %1342 = vdwg.mxu0
  %1343 = vmatpush.bf16.msra.mxu0 %v1028
  %1344 = vmatpush.bf16.msra.mxu0 %v1027
  %1345 = vmatpush.bf16.msra.mxu0 %v1026
  %1346 = vmatpush.bf16.msra.mxu0 %v1025
  %1347 = vmatpush.bf16.msra.mxu0 %v1024
  %1348 = vmatpush.bf16.msra.mxu0 %v1023
  %1349 = vmatpush.bf16.msra.mxu0 %v1022
  %1350 = vmatpush.bf16.msra.mxu0 %v1021
  %1351 = vmatmul.bf16.gmra.mxu0 %v403
  %v1352 = vpop.f32.mrf.mxu0
  %v1353 = vadd.f32 %v1334, %v1352
  %v1354 = vpop.f32.mrf.mxu0
  %v1355 = vadd.f32 %v1336, %v1354
  %1356 = vmatmul.bf16.gmra.mxu0 %v419
  %v1357 = vpop.f32.mrf.mxu0
  %v1358 = vadd.f32 %v1339, %v1357
  %v1359 = vpop.f32.mrf.mxu0
  %v1360 = vadd.f32 %v1341, %v1359
  %1361 = vdwg.mxu0
  %1362 = vmatpush.bf16.msra.mxu0 %v1036
  %1363 = vmatpush.bf16.msra.mxu0 %v1035
  %1364 = vmatpush.bf16.msra.mxu0 %v1034
  %1365 = vmatpush.bf16.msra.mxu0 %v1033
  %1366 = vmatpush.bf16.msra.mxu0 %v1032
  %1367 = vmatpush.bf16.msra.mxu0 %v1031
  %1368 = vmatpush.bf16.msra.mxu0 %v1030
  %1369 = vmatpush.bf16.msra.mxu0 %v1029
  %1370 = vmatmul.bf16.gmra.mxu0 %v404
  %v1371 = vpop.f32.mrf.mxu0
  %v1372 = vadd.f32 %v1353, %v1371
  %v1373 = vpop.f32.mrf.mxu0
  %v1374 = vadd.f32 %v1355, %v1373
  %1375 = vmatmul.bf16.gmra.mxu0 %v420
  %v1376 = vpop.f32.mrf.mxu0
  %v1377 = vadd.f32 %v1358, %v1376
  %v1378 = vpop.f32.mrf.mxu0
  %v1379 = vadd.f32 %v1360, %v1378
  %1380 = vdwg.mxu0
  %1381 = vmatpush.bf16.msra.mxu0 %v1044
  %1382 = vmatpush.bf16.msra.mxu0 %v1043
  %1383 = vmatpush.bf16.msra.mxu0 %v1042
  %1384 = vmatpush.bf16.msra.mxu0 %v1041
  %1385 = vmatpush.bf16.msra.mxu0 %v1040
  %1386 = vmatpush.bf16.msra.mxu0 %v1039
  %1387 = vmatpush.bf16.msra.mxu0 %v1038
  %1388 = vmatpush.bf16.msra.mxu0 %v1037
  %1389 = vmatmul.bf16.gmra.mxu0 %v405
  %v1390 = vpop.f32.mrf.mxu0
  %v1391 = vadd.f32 %v1372, %v1390
  %v1392 = vpop.f32.mrf.mxu0
  %v1393 = vadd.f32 %v1374, %v1392
  %1394 = vmatmul.bf16.gmra.mxu0 %v421
  %v1395 = vpop.f32.mrf.mxu0
  %v1396 = vadd.f32 %v1377, %v1395
  %v1397 = vpop.f32.mrf.mxu0
  %v1398 = vadd.f32 %v1379, %v1397
  %1399 = vdwg.mxu0
  %1400 = vmatpush.bf16.msra.mxu0 %v1052
  %1401 = vmatpush.bf16.msra.mxu0 %v1051
  %1402 = vmatpush.bf16.msra.mxu0 %v1050
  %1403 = vmatpush.bf16.msra.mxu0 %v1049
  %1404 = vmatpush.bf16.msra.mxu0 %v1048
  %1405 = vmatpush.bf16.msra.mxu0 %v1047
  %1406 = vmatpush.bf16.msra.mxu0 %v1046
  %1407 = vmatpush.bf16.msra.mxu0 %v1045
  %1408 = vmatmul.bf16.gmra.mxu0 %v406
  %v1409 = vpop.f32.mrf.mxu0
  %v1410 = vadd.f32 %v1391, %v1409
  %v1411 = vpop.f32.mrf.mxu0
  %v1412 = vadd.f32 %v1393, %v1411
  %1413 = vmatmul.bf16.gmra.mxu0 %v422
  %v1414 = vpop.f32.mrf.mxu0
  %v1415 = vadd.f32 %v1396, %v1414
  %v1416 = vpop.f32.mrf.mxu0
  %v1417 = vadd.f32 %v1398, %v1416
  %1418 = vdwg.mxu0
  %1419 = vmatpush.bf16.msra.mxu0 %v1060
  %1420 = vmatpush.bf16.msra.mxu0 %v1059
  %1421 = vmatpush.bf16.msra.mxu0 %v1058
  %1422 = vmatpush.bf16.msra.mxu0 %v1057
  %1423 = vmatpush.bf16.msra.mxu0 %v1056
  %1424 = vmatpush.bf16.msra.mxu0 %v1055
  %1425 = vmatpush.bf16.msra.mxu0 %v1054
  %1426 = vmatpush.bf16.msra.mxu0 %v1053
  %1427 = vmatmul.bf16.gmra.mxu0 %v407
  %v1428 = vpop.f32.mrf.mxu0
  %v1429 = vadd.f32 %v1410, %v1428
  %v1430 = vpop.f32.mrf.mxu0
  %v1431 = vadd.f32 %v1412, %v1430
  %1432 = vmatmul.bf16.gmra.mxu0 %v423
  %v1433 = vpop.f32.mrf.mxu0
  %v1434 = vadd.f32 %v1415, %v1433
  %v1435 = vpop.f32.mrf.mxu0
  %v1436 = vadd.f32 %v1417, %v1435
  %1437 = vdwg.mxu0
  %1438 = vmatpush.bf16.msra.mxu0 %v1068
  %1439 = vmatpush.bf16.msra.mxu0 %v1067
  %1440 = vmatpush.bf16.msra.mxu0 %v1066
  %1441 = vmatpush.bf16.msra.mxu0 %v1065
  %1442 = vmatpush.bf16.msra.mxu0 %v1064
  %1443 = vmatpush.bf16.msra.mxu0 %v1063
  %1444 = vmatpush.bf16.msra.mxu0 %v1062
  %1445 = vmatpush.bf16.msra.mxu0 %v1061
  %1446 = vmatmul.bf16.gmra.mxu0 %v408
  %v1447 = vpop.f32.mrf.mxu0
  %v1448 = vadd.f32 %v1429, %v1447
  %v1449 = vpop.f32.mrf.mxu0
  %v1450 = vadd.f32 %v1431, %v1449
  %1451 = vmatmul.bf16.gmra.mxu0 %v424
  %v1452 = vpop.f32.mrf.mxu0
  %v1453 = vadd.f32 %v1434, %v1452
  %v1454 = vpop.f32.mrf.mxu0
  %v1455 = vadd.f32 %v1436, %v1454
  %1456 = vdwg.mxu0
  %1457 = vmatpush.bf16.msra.mxu0 %v1076
  %1458 = vmatpush.bf16.msra.mxu0 %v1075
  %1459 = vmatpush.bf16.msra.mxu0 %v1074
  %1460 = vmatpush.bf16.msra.mxu0 %v1073
  %1461 = vmatpush.bf16.msra.mxu0 %v1072
  %1462 = vmatpush.bf16.msra.mxu0 %v1071
  %1463 = vmatpush.bf16.msra.mxu0 %v1070
  %1464 = vmatpush.bf16.msra.mxu0 %v1069
  %1465 = vmatmul.bf16.gmra.mxu0 %v409
  %v1466 = vpop.f32.mrf.mxu0
  %v1467 = vadd.f32 %v1448, %v1466
  %v1468 = vpop.f32.mrf.mxu0
  %v1469 = vadd.f32 %v1450, %v1468
  %1470 = vmatmul.bf16.gmra.mxu0 %v425
  %v1471 = vpop.f32.mrf.mxu0
  %v1472 = vadd.f32 %v1453, %v1471
  %v1473 = vpop.f32.mrf.mxu0
  %v1474 = vadd.f32 %v1455, %v1473
  %1475 = vdwg.mxu0
  %1476 = vmatpush.bf16.msra.mxu0 %v1084
  %1477 = vmatpush.bf16.msra.mxu0 %v1083
  %1478 = vmatpush.bf16.msra.mxu0 %v1082
  %1479 = vmatpush.bf16.msra.mxu0 %v1081
  %1480 = vmatpush.bf16.msra.mxu0 %v1080
  %1481 = vmatpush.bf16.msra.mxu0 %v1079
  %1482 = vmatpush.bf16.msra.mxu0 %v1078
  %1483 = vmatpush.bf16.msra.mxu0 %v1077
  %1484 = vmatmul.bf16.gmra.mxu0 %v410
  %v1485 = vpop.f32.mrf.mxu0
  %v1486 = vadd.f32 %v1467, %v1485
  %v1487 = vpop.f32.mrf.mxu0
  %v1488 = vadd.f32 %v1469, %v1487
  %1489 = vmatmul.bf16.gmra.mxu0 %v426
  %v1490 = vpop.f32.mrf.mxu0
  %v1491 = vadd.f32 %v1472, %v1490
  %v1492 = vpop.f32.mrf.mxu0
  %v1493 = vadd.f32 %v1474, %v1492
  %1494 = vdwg.mxu0
  %1495 = vmatpush.bf16.msra.mxu0 %v1092
  %1496 = vmatpush.bf16.msra.mxu0 %v1091
  %1497 = vmatpush.bf16.msra.mxu0 %v1090
  %1498 = vmatpush.bf16.msra.mxu0 %v1089
  %1499 = vmatpush.bf16.msra.mxu0 %v1088
  %1500 = vmatpush.bf16.msra.mxu0 %v1087
  %1501 = vmatpush.bf16.msra.mxu0 %v1086
  %1502 = vmatpush.bf16.msra.mxu0 %v1085
  %1503 = vmatmul.bf16.gmra.mxu0 %v411
  %v1504 = vpop.f32.mrf.mxu0
  %v1505 = vadd.f32 %v1486, %v1504
  %v1506 = vpop.f32.mrf.mxu0
  %v1507 = vadd.f32 %v1488, %v1506
  %1508 = vmatmul.bf16.gmra.mxu0 %v427
  %v1509 = vpop.f32.mrf.mxu0
  %v1510 = vadd.f32 %v1491, %v1509
  %v1511 = vpop.f32.mrf.mxu0
  %v1512 = vadd.f32 %v1493, %v1511
  %1513 = vdwg.mxu0
  %1514 = vmatpush.bf16.msra.mxu0 %v1100
  %1515 = vmatpush.bf16.msra.mxu0 %v1099
  %1516 = vmatpush.bf16.msra.mxu0 %v1098
  %1517 = vmatpush.bf16.msra.mxu0 %v1097
  %1518 = vmatpush.bf16.msra.mxu0 %v1096
  %1519 = vmatpush.bf16.msra.mxu0 %v1095
  %1520 = vmatpush.bf16.msra.mxu0 %v1094
  %1521 = vmatpush.bf16.msra.mxu0 %v1093
  %1522 = vmatmul.bf16.gmra.mxu0 %v412
  %v1523 = vpop.f32.mrf.mxu0
  %v1524 = vadd.f32 %v1505, %v1523
  %v1525 = vpop.f32.mrf.mxu0
  %v1526 = vadd.f32 %v1507, %v1525
  %1527 = vmatmul.bf16.gmra.mxu0 %v428
  %v1528 = vpop.f32.mrf.mxu0
  %v1529 = vadd.f32 %v1510, %v1528
  %v1530 = vpop.f32.mrf.mxu0
  %v1531 = vadd.f32 %v1512, %v1530
  %1532 = vdwg.mxu0
  %1533 = vst [vmem:[%s2] sm:$0xff] %v1524
  %1534 = vst [vmem:[%s2 + $0x8] sm:$0xff] %v1526
  %1535 = vst [vmem:[%s2 + $0x10] sm:$0xff] %v1529
  %1536 = vst [vmem:[%s2 + $0x18] sm:$0xff] %v1531
  %v1537 = vadd.f32 %v1524, %v1526
  %v1538 = vadd.f32 %v1537, %v1529
  %v1539 = vadd.f32 %v1538, %v1531
  %v1540 = vrot.slane %v1539, 4
  %v1541 = vadd.f32 %v1539, %v1540
  %v1542 = vrot.slane %v1541, 2
  %v1543 = vadd.f32 %v1541, %v1542
  %v1544 = vrot.slane %v1543, 1
  %v1545 = vadd.f32 %v1543, %v1544
  %v1546 = vmul.f32 %v1524, %v1524
  %v1547 = vmul.f32 %v1526, %v1526
  %v1548 = vmul.f32 %v1529, %v1529
  %v1549 = vmul.f32 %v1531, %v1531
  %v1550 = vadd.f32 %v1546, %v1547
  %v1551 = vadd.f32 %v1550, %v1548
  %v1552 = vadd.f32 %v1551, %v1549
  %v1553 = vrot.slane %v1552, 4
  %v1554 = vadd.f32 %v1552, %v1553
  %v1555 = vrot.slane %v1554, 2
  %v1556 = vadd.f32 %v1554, %v1555
  %v1557 = vrot.slane %v1556, 1
  %v1558 = vadd.f32 %v1556, %v1557
  %vm1559 = vcmask 1040384
  %v1560 = vsel %vm1559, %v1545, %v1558
  %1561 = vst [vmem:[%s3] sm:$0x3] %v1560
  // Predicated region
  $region10: #{encoders_forward.7} parent=0 // pred_check
    _
  $region11: #{encoders_forward.7} parent=0 // pred_check_branch
    %1563 = sbr.rel (0) target = $region13
  $region12: #{encoders_forward.7} parent=0 // pred_region
    _
  $region13: #{encoders_forward.7} parent=0 // pred_fallthru
    _
  // Predicated region
  $region14: #{encoders_forward.7} parent=0 // pred_check
    _
  $region15: #{encoders_forward.7} parent=0 // pred_check_branch
    %1565 = sbr.rel (0) target = $region17
  $region16: #{encoders_forward.7} parent=0 // pred_region
    _
  $region17: #{encoders_forward.7} parent=0 // pred_fallthru
    _
  // Predicated region
  $region18: #{encoders_forward.7} parent=0 // pred_check
    _
  $region19: #{encoders_forward.7} parent=0 // pred_check_branch
    %1567 = sbr.rel (0) target = $region21
  $region20: #{encoders_forward.7} parent=0 // pred_region
    _
  $region21: #{encoders_forward.7} parent=0 // pred_fallthru
    _
  // Predicated region
  $region22: #{encoders_forward.7} parent=0 // pred_check
    _
  $region23: #{encoders_forward.7} parent=0 // pred_check_branch
    %1569 = sbr.rel (0) target = $region25
  $region24: #{encoders_forward.7} parent=0 // pred_region
    _
  $region25: #{encoders_forward.7} parent=0 // pred_fallthru
    _

// kernel: encoders_forward.9
$region0: #{encoders_forward.9}
  #allocation0 [shape = 'u32[]', space=smem, size = 0x4, offset = 0x4, fixed_abs, tag = 'smem constant byte address 0x4 - core index']
  #allocation1 [shape = 'u32[72,128]{1,0:T(1,128)}', space=vmem, size = 0x9000, scoped, tag = 'internal scratch']
  %s0 = inlined_call_operand.vmem [shape: bf16[2,2048], index: 0, kind: input, shape index: {}]
  %s1 = inlined_call_operand.vmem [shape: bf16[2048,128], index: 1, kind: input, shape index: {}]
  %s2 = inlined_call_operand.hbm [shape: f32[2,128], index: 2, kind: output, shape index: {}]
  %s3 = sld [smem:[#allocation0]]
  $region18: #{encoders_forward.9} parent=0
    _
  %s5 = ssub.s32 1, %s3
  %s6 = scalar_select 0, %s5, %s3
  $region1: #{encoders_forward.9} parent=0
    #allocation2 [shape = 'u8[1024]{0}', space=vmem, size = 0x400, scoped, tag = 'output window, operand 0, single buffered']
    #allocation3 [shape = 's32[1]{0}', space=sflag, size = 0x4, scoped, tag = 'scoped memory for encoders_forward.9']
    %7 = vsyncpa [#allocation3], 0
    // Predicated region
    $region2: #{encoders_forward.9} parent=1 // pred_check
      _
    $region3: #{encoders_forward.9} parent=1 // pred_check_branch
      %9 = sbr.rel (0) target = $region5
    $region4: #{encoders_forward.9} parent=1 // pred_region
      _
    $region5: #{encoders_forward.9} parent=1 // pred_fallthru
      _
    // Predicated region
    $region6: #{encoders_forward.9} parent=1 // pred_check
      _
    $region7: #{encoders_forward.9} parent=1 // pred_check_branch
      %11 = sbr.rel (0) target = $region9
    $region8: #{encoders_forward.9} parent=1 // pred_region
      _
    $region9: #{encoders_forward.9} parent=1 // pred_fallthru
      _
    %v12 = vld [vmem:[%s0] sm:$0xff]
    %v13 = vld [vmem:[%s0 + $0x8] sm:$0xff]
    %v14 = vld [vmem:[%s1] sm:$0xf]
    %v15 = vld [vmem:[%s1 + $0x4] sm:$0xf]
    %v16 = vld [vmem:[%s1 + $0x8] sm:$0xf]
    %v17 = vld [vmem:[%s1 + $0xc] sm:$0xf]
    %v18 = vld [vmem:[%s1 + $0x10] sm:$0xf]
    %v19 = vld [vmem:[%s1 + $0x14] sm:$0xf]
    %v20 = vld [vmem:[%s1 + $0x18] sm:$0xf]
    %v21 = vld [vmem:[%s1 + $0x1c] sm:$0xf]
    %v22 = vld [vmem:[%s1 + $0x20] sm:$0xf]
    %v23 = vld [vmem:[%s1 + $0x24] sm:$0xf]
    %v24 = vld [vmem:[%s1 + $0x28] sm:$0xf]
    %v25 = vld [vmem:[%s1 + $0x2c] sm:$0xf]
    %v26 = vld [vmem:[%s1 + $0x30] sm:$0xf]
    %v27 = vld [vmem:[%s1 + $0x34] sm:$0xf]
    %v28 = vld [vmem:[%s1 + $0x38] sm:$0xf]
    %v29 = vld [vmem:[%s1 + $0x3c] sm:$0xf]
    %v30 = vld [vmem:[%s1 + $0x40] sm:$0xf]
    %v31 = vld [vmem:[%s1 + $0x44] sm:$0xf]
    %v32 = vld [vmem:[%s1 + $0x48] sm:$0xf]
    %v33 = vld [vmem:[%s1 + $0x4c] sm:$0xf]
    %v34 = vld [vmem:[%s1 + $0x50] sm:$0xf]
    %v35 = vld [vmem:[%s1 + $0x54] sm:$0xf]
    %v36 = vld [vmem:[%s1 + $0x58] sm:$0xf]
    %v37 = vld [vmem:[%s1 + $0x5c] sm:$0xf]
    %v38 = vld [vmem:[%s1 + $0x60] sm:$0xf]
    %v39 = vld [vmem:[%s1 + $0x64] sm:$0xf]
    %v40 = vld [vmem:[%s1 + $0x68] sm:$0xf]
    %v41 = vld [vmem:[%s1 + $0x6c] sm:$0xf]
    %v42 = vld [vmem:[%s1 + $0x70] sm:$0xf]
    %v43 = vld [vmem:[%s1 + $0x74] sm:$0xf]
    %v44 = vld [vmem:[%s1 + $0x78] sm:$0xf]
    %v45 = vld [vmem:[%s1 + $0x7c] sm:$0xf]
    %v46 = vld [vmem:[%s1 + $0x80] sm:$0xf]
    %v47 = vld [vmem:[%s1 + $0x84] sm:$0xf]
    %v48 = vld [vmem:[%s1 + $0x88] sm:$0xf]
    %v49 = vld [vmem:[%s1 + $0x8c] sm:$0xf]
    %v50 = vld [vmem:[%s1 + $0x90] sm:$0xf]
    %v51 = vld [vmem:[%s1 + $0x94] sm:$0xf]
    %v52 = vld [vmem:[%s1 + $0x98] sm:$0xf]
    %v53 = vld [vmem:[%s1 + $0x9c] sm:$0xf]
    %v54 = vld [vmem:[%s1 + $0xa0] sm:$0xf]
    %v55 = vld [vmem:[%s1 + $0xa4] sm:$0xf]
    %v56 = vld [vmem:[%s1 + $0xa8] sm:$0xf]
    %v57 = vld [vmem:[%s1 + $0xac] sm:$0xf]
    %v58 = vld [vmem:[%s1 + $0xb0] sm:$0xf]
    %v59 = vld [vmem:[%s1 + $0xb4] sm:$0xf]
    %v60 = vld [vmem:[%s1 + $0xb8] sm:$0xf]
    %v61 = vld [vmem:[%s1 + $0xbc] sm:$0xf]
    %v62 = vld [vmem:[%s1 + $0xc0] sm:$0xf]
    %v63 = vld [vmem:[%s1 + $0xc4] sm:$0xf]
    %v64 = vld [vmem:[%s1 + $0xc8] sm:$0xf]
    %v65 = vld [vmem:[%s1 + $0xcc] sm:$0xf]
    %v66 = vld [vmem:[%s1 + $0xd0] sm:$0xf]
    %v67 = vld [vmem:[%s1 + $0xd4] sm:$0xf]
    %v68 = vld [vmem:[%s1 + $0xd8] sm:$0xf]
    %v69 = vld [vmem:[%s1 + $0xdc] sm:$0xf]
    %v70 = vld [vmem:[%s1 + $0xe0] sm:$0xf]
    %v71 = vld [vmem:[%s1 + $0xe4] sm:$0xf]
    %v72 = vld [vmem:[%s1 + $0xe8] sm:$0xf]
    %v73 = vld [vmem:[%s1 + $0xec] sm:$0xf]
    %v74 = vld [vmem:[%s1 + $0xf0] sm:$0xf]
    %v75 = vld [vmem:[%s1 + $0xf4] sm:$0xf]
    %v76 = vld [vmem:[%s1 + $0xf8] sm:$0xf]
    %v77 = vld [vmem:[%s1 + $0xfc] sm:$0xf]
    %v78 = vld [vmem:[%s1 + $0x100] sm:$0xf]
    %v79 = vld [vmem:[%s1 + $0x104] sm:$0xf]
    %v80 = vld [vmem:[%s1 + $0x108] sm:$0xf]
    %v81 = vld [vmem:[%s1 + $0x10c] sm:$0xf]
    %v82 = vld [vmem:[%s1 + $0x110] sm:$0xf]
    %v83 = vld [vmem:[%s1 + $0x114] sm:$0xf]
    %v84 = vld [vmem:[%s1 + $0x118] sm:$0xf]
    %v85 = vld [vmem:[%s1 + $0x11c] sm:$0xf]
    %v86 = vld [vmem:[%s1 + $0x120] sm:$0xf]
    %v87 = vld [vmem:[%s1 + $0x124] sm:$0xf]
    %v88 = vld [vmem:[%s1 + $0x128] sm:$0xf]
    %v89 = vld [vmem:[%s1 + $0x12c] sm:$0xf]
    %v90 = vld [vmem:[%s1 + $0x130] sm:$0xf]
    %v91 = vld [vmem:[%s1 + $0x134] sm:$0xf]
    %v92 = vld [vmem:[%s1 + $0x138] sm:$0xf]
    %v93 = vld [vmem:[%s1 + $0x13c] sm:$0xf]
    %v94 = vld [vmem:[%s1 + $0x140] sm:$0xf]
    %v95 = vld [vmem:[%s1 + $0x144] sm:$0xf]
    %v96 = vld [vmem:[%s1 + $0x148] sm:$0xf]
    %v97 = vld [vmem:[%s1 + $0x14c] sm:$0xf]
    %v98 = vld [vmem:[%s1 + $0x150] sm:$0xf]
    %v99 = vld [vmem:[%s1 + $0x154] sm:$0xf]
    %v100 = vld [vmem:[%s1 + $0x158] sm:$0xf]
    %v101 = vld [vmem:[%s1 + $0x15c] sm:$0xf]
    %v102 = vld [vmem:[%s1 + $0x160] sm:$0xf]
    %v103 = vld [vmem:[%s1 + $0x164] sm:$0xf]
    %v104 = vld [vmem:[%s1 + $0x168] sm:$0xf]
    %v105 = vld [vmem:[%s1 + $0x16c] sm:$0xf]
    %v106 = vld [vmem:[%s1 + $0x170] sm:$0xf]
    %v107 = vld [vmem:[%s1 + $0x174] sm:$0xf]
    %v108 = vld [vmem:[%s1 + $0x178] sm:$0xf]
    %v109 = vld [vmem:[%s1 + $0x17c] sm:$0xf]
    %v110 = vld [vmem:[%s1 + $0x180] sm:$0xf]
    %v111 = vld [vmem:[%s1 + $0x184] sm:$0xf]
    %v112 = vld [vmem:[%s1 + $0x188] sm:$0xf]
    %v113 = vld [vmem:[%s1 + $0x18c] sm:$0xf]
    %v114 = vld [vmem:[%s1 + $0x190] sm:$0xf]
    %v115 = vld [vmem:[%s1 + $0x194] sm:$0xf]
    %v116 = vld [vmem:[%s1 + $0x198] sm:$0xf]
    %v117 = vld [vmem:[%s1 + $0x19c] sm:$0xf]
    %v118 = vld [vmem:[%s1 + $0x1a0] sm:$0xf]
    %v119 = vld [vmem:[%s1 + $0x1a4] sm:$0xf]
    %v120 = vld [vmem:[%s1 + $0x1a8] sm:$0xf]
    %v121 = vld [vmem:[%s1 + $0x1ac] sm:$0xf]
    %v122 = vld [vmem:[%s1 + $0x1b0] sm:$0xf]
    %v123 = vld [vmem:[%s1 + $0x1b4] sm:$0xf]
    %v124 = vld [vmem:[%s1 + $0x1b8] sm:$0xf]
    %v125 = vld [vmem:[%s1 + $0x1bc] sm:$0xf]
    %v126 = vld [vmem:[%s1 + $0x1c0] sm:$0xf]
    %v127 = vld [vmem:[%s1 + $0x1c4] sm:$0xf]
    %v128 = vld [vmem:[%s1 + $0x1c8] sm:$0xf]
    %v129 = vld [vmem:[%s1 + $0x1cc] sm:$0xf]
    %v130 = vld [vmem:[%s1 + $0x1d0] sm:$0xf]
    %v131 = vld [vmem:[%s1 + $0x1d4] sm:$0xf]
    %v132 = vld [vmem:[%s1 + $0x1d8] sm:$0xf]
    %v133 = vld [vmem:[%s1 + $0x1dc] sm:$0xf]
    %v134 = vld [vmem:[%s1 + $0x1e0] sm:$0xf]
    %v135 = vld [vmem:[%s1 + $0x1e4] sm:$0xf]
    %v136 = vld [vmem:[%s1 + $0x1e8] sm:$0xf]
    %v137 = vld [vmem:[%s1 + $0x1ec] sm:$0xf]
    %v138 = vld [vmem:[%s1 + $0x1f0] sm:$0xf]
    %v139 = vld [vmem:[%s1 + $0x1f4] sm:$0xf]
    %v140 = vld [vmem:[%s1 + $0x1f8] sm:$0xf]
    %v141 = vld [vmem:[%s1 + $0x1fc] sm:$0xf]
    %v142 = vld [vmem:[%s1 + $0x200] sm:$0xf]
    %v143 = vld [vmem:[%s1 + $0x204] sm:$0xf]
    %v144 = vld [vmem:[%s1 + $0x208] sm:$0xf]
    %v145 = vld [vmem:[%s1 + $0x20c] sm:$0xf]
    %v146 = vld [vmem:[%s1 + $0x210] sm:$0xf]
    %v147 = vld [vmem:[%s1 + $0x214] sm:$0xf]
    %v148 = vld [vmem:[%s1 + $0x218] sm:$0xf]
    %v149 = vld [vmem:[%s1 + $0x21c] sm:$0xf]
    %v150 = vld [vmem:[%s1 + $0x220] sm:$0xf]
    %v151 = vld [vmem:[%s1 + $0x224] sm:$0xf]
    %v152 = vld [vmem:[%s1 + $0x228] sm:$0xf]
    %v153 = vld [vmem:[%s1 + $0x22c] sm:$0xf]
    %v154 = vld [vmem:[%s1 + $0x230] sm:$0xf]
    %v155 = vld [vmem:[%s1 + $0x234] sm:$0xf]
    %v156 = vld [vmem:[%s1 + $0x238] sm:$0xf]
    %v157 = vld [vmem:[%s1 + $0x23c] sm:$0xf]
    %v158 = vld [vmem:[%s1 + $0x240] sm:$0xf]
    %v159 = vld [vmem:[%s1 + $0x244] sm:$0xf]
    %v160 = vld [vmem:[%s1 + $0x248] sm:$0xf]
    %v161 = vld [vmem:[%s1 + $0x24c] sm:$0xf]
    %v162 = vld [vmem:[%s1 + $0x250] sm:$0xf]
    %v163 = vld [vmem:[%s1 + $0x254] sm:$0xf]
    %v164 = vld [vmem:[%s1 + $0x258] sm:$0xf]
    %v165 = vld [vmem:[%s1 + $0x25c] sm:$0xf]
    %v166 = vld [vmem:[%s1 + $0x260] sm:$0xf]
    %v167 = vld [vmem:[%s1 + $0x264] sm:$0xf]
    %v168 = vld [vmem:[%s1 + $0x268] sm:$0xf]
    %v169 = vld [vmem:[%s1 + $0x26c] sm:$0xf]
    %v170 = vld [vmem:[%s1 + $0x270] sm:$0xf]
    %v171 = vld [vmem:[%s1 + $0x274] sm:$0xf]
    %v172 = vld [vmem:[%s1 + $0x278] sm:$0xf]
    %v173 = vld [vmem:[%s1 + $0x27c] sm:$0xf]
    %v174 = vld [vmem:[%s1 + $0x280] sm:$0xf]
    %v175 = vld [vmem:[%s1 + $0x284] sm:$0xf]
    %v176 = vld [vmem:[%s1 + $0x288] sm:$0xf]
    %v177 = vld [vmem:[%s1 + $0x28c] sm:$0xf]
    %v178 = vld [vmem:[%s1 + $0x290] sm:$0xf]
    %v179 = vld [vmem:[%s1 + $0x294] sm:$0xf]
    %v180 = vld [vmem:[%s1 + $0x298] sm:$0xf]
    %v181 = vld [vmem:[%s1 + $0x29c] sm:$0xf]
    %v182 = vld [vmem:[%s1 + $0x2a0] sm:$0xf]
    %v183 = vld [vmem:[%s1 + $0x2a4] sm:$0xf]
    %v184 = vld [vmem:[%s1 + $0x2a8] sm:$0xf]
    %v185 = vld [vmem:[%s1 + $0x2ac] sm:$0xf]
    %v186 = vld [vmem:[%s1 + $0x2b0] sm:$0xf]
    %v187 = vld [vmem:[%s1 + $0x2b4] sm:$0xf]
    %v188 = vld [vmem:[%s1 + $0x2b8] sm:$0xf]
    %v189 = vld [vmem:[%s1 + $0x2bc] sm:$0xf]
    %v190 = vld [vmem:[%s1 + $0x2c0] sm:$0xf]
    %v191 = vld [vmem:[%s1 + $0x2c4] sm:$0xf]
    %v192 = vld [vmem:[%s1 + $0x2c8] sm:$0xf]
    %v193 = vld [vmem:[%s1 + $0x2cc] sm:$0xf]
    %v194 = vld [vmem:[%s1 + $0x2d0] sm:$0xf]
    %v195 = vld [vmem:[%s1 + $0x2d4] sm:$0xf]
    %v196 = vld [vmem:[%s1 + $0x2d8] sm:$0xf]
    %v197 = vld [vmem:[%s1 + $0x2dc] sm:$0xf]
    %v198 = vld [vmem:[%s1 + $0x2e0] sm:$0xf]
    %v199 = vld [vmem:[%s1 + $0x2e4] sm:$0xf]
    %v200 = vld [vmem:[%s1 + $0x2e8] sm:$0xf]
    %v201 = vld [vmem:[%s1 + $0x2ec] sm:$0xf]
    %v202 = vld [vmem:[%s1 + $0x2f0] sm:$0xf]
    %v203 = vld [vmem:[%s1 + $0x2f4] sm:$0xf]
    %v204 = vld [vmem:[%s1 + $0x2f8] sm:$0xf]
    %v205 = vld [vmem:[%s1 + $0x2fc] sm:$0xf]
    %v206 = vld [vmem:[%s1 + $0x300] sm:$0xf]
    %v207 = vld [vmem:[%s1 + $0x304] sm:$0xf]
    %v208 = vld [vmem:[%s1 + $0x308] sm:$0xf]
    %v209 = vld [vmem:[%s1 + $0x30c] sm:$0xf]
    %v210 = vld [vmem:[%s1 + $0x310] sm:$0xf]
    %v211 = vld [vmem:[%s1 + $0x314] sm:$0xf]
    %v212 = vld [vmem:[%s1 + $0x318] sm:$0xf]
    %v213 = vld [vmem:[%s1 + $0x31c] sm:$0xf]
    %v214 = vld [vmem:[%s1 + $0x320] sm:$0xf]
    %v215 = vld [vmem:[%s1 + $0x324] sm:$0xf]
    %v216 = vld [vmem:[%s1 + $0x328] sm:$0xf]
    %v217 = vld [vmem:[%s1 + $0x32c] sm:$0xf]
    %v218 = vld [vmem:[%s1 + $0x330] sm:$0xf]
    %v219 = vld [vmem:[%s1 + $0x334] sm:$0xf]
    %v220 = vld [vmem:[%s1 + $0x338] sm:$0xf]
    %v221 = vld [vmem:[%s1 + $0x33c] sm:$0xf]
    %v222 = vld [vmem:[%s1 + $0x340] sm:$0xf]
    %v223 = vld [vmem:[%s1 + $0x344] sm:$0xf]
    %v224 = vld [vmem:[%s1 + $0x348] sm:$0xf]
    %v225 = vld [vmem:[%s1 + $0x34c] sm:$0xf]
    %v226 = vld [vmem:[%s1 + $0x350] sm:$0xf]
    %v227 = vld [vmem:[%s1 + $0x354] sm:$0xf]
    %v228 = vld [vmem:[%s1 + $0x358] sm:$0xf]
    %v229 = vld [vmem:[%s1 + $0x35c] sm:$0xf]
    %v230 = vld [vmem:[%s1 + $0x360] sm:$0xf]
    %v231 = vld [vmem:[%s1 + $0x364] sm:$0xf]
    %v232 = vld [vmem:[%s1 + $0x368] sm:$0xf]
    %v233 = vld [vmem:[%s1 + $0x36c] sm:$0xf]
    %v234 = vld [vmem:[%s1 + $0x370] sm:$0xf]
    %v235 = vld [vmem:[%s1 + $0x374] sm:$0xf]
    %v236 = vld [vmem:[%s1 + $0x378] sm:$0xf]
    %v237 = vld [vmem:[%s1 + $0x37c] sm:$0xf]
    %v238 = vld [vmem:[%s1 + $0x380] sm:$0xf]
    %v239 = vld [vmem:[%s1 + $0x384] sm:$0xf]
    %v240 = vld [vmem:[%s1 + $0x388] sm:$0xf]
    %v241 = vld [vmem:[%s1 + $0x38c] sm:$0xf]
    %v242 = vld [vmem:[%s1 + $0x390] sm:$0xf]
    %v243 = vld [vmem:[%s1 + $0x394] sm:$0xf]
    %v244 = vld [vmem:[%s1 + $0x398] sm:$0xf]
    %v245 = vld [vmem:[%s1 + $0x39c] sm:$0xf]
    %v246 = vld [vmem:[%s1 + $0x3a0] sm:$0xf]
    %v247 = vld [vmem:[%s1 + $0x3a4] sm:$0xf]
    %v248 = vld [vmem:[%s1 + $0x3a8] sm:$0xf]
    %v249 = vld [vmem:[%s1 + $0x3ac] sm:$0xf]
    %v250 = vld [vmem:[%s1 + $0x3b0] sm:$0xf]
    %v251 = vld [vmem:[%s1 + $0x3b4] sm:$0xf]
    %v252 = vld [vmem:[%s1 + $0x3b8] sm:$0xf]
    %v253 = vld [vmem:[%s1 + $0x3bc] sm:$0xf]
    %v254 = vld [vmem:[%s1 + $0x3c0] sm:$0xf]
    %v255 = vld [vmem:[%s1 + $0x3c4] sm:$0xf]
    %v256 = vld [vmem:[%s1 + $0x3c8] sm:$0xf]
    %v257 = vld [vmem:[%s1 + $0x3cc] sm:$0xf]
    %v258 = vld [vmem:[%s1 + $0x3d0] sm:$0xf]
    %v259 = vld [vmem:[%s1 + $0x3d4] sm:$0xf]
    %v260 = vld [vmem:[%s1 + $0x3d8] sm:$0xf]
    %v261 = vld [vmem:[%s1 + $0x3dc] sm:$0xf]
    %v262 = vld [vmem:[%s1 + $0x3e0] sm:$0xf]
    %v263 = vld [vmem:[%s1 + $0x3e4] sm:$0xf]
    %v264 = vld [vmem:[%s1 + $0x3e8] sm:$0xf]
    %v265 = vld [vmem:[%s1 + $0x3ec] sm:$0xf]
    %v266 = vld [vmem:[%s1 + $0x3f0] sm:$0xf]
    %v267 = vld [vmem:[%s1 + $0x3f4] sm:$0xf]
    %v268 = vld [vmem:[%s1 + $0x3f8] sm:$0xf]
    %v269 = vld [vmem:[%s1 + $0x3fc] sm:$0xf]
    %271 = vst [vmem:[#allocation1] ss:$9 sm:$0xff] %v12
    %v272 = vld [vmem:[#allocation1] sm:$0xff]
    %v273 = vld [vmem:[#allocation1 + $0x9] sm:$0xff]
    %v274 = vld [vmem:[#allocation1 + $0x12] sm:$0xff]
    %v275 = vld [vmem:[#allocation1 + $0x1b] sm:$0xff]
    %v276 = vld [vmem:[#allocation1 + $0x24] sm:$0xff]
    %v277 = vld [vmem:[#allocation1 + $0x2d] sm:$0xff]
    %v278 = vld [vmem:[#allocation1 + $0x36] sm:$0xff]
    %v279 = vld [vmem:[#allocation1 + $0x3f] sm:$0xff]
    %281 = vst [vmem:[#allocation1] ss:$9 sm:$0xff] %v13
    %v282 = vld [vmem:[#allocation1] sm:$0xff]
    %v283 = vld [vmem:[#allocation1 + $0x9] sm:$0xff]
    %v284 = vld [vmem:[#allocation1 + $0x12] sm:$0xff]
    %v285 = vld [vmem:[#allocation1 + $0x1b] sm:$0xff]
    %v286 = vld [vmem:[#allocation1 + $0x24] sm:$0xff]
    %v287 = vld [vmem:[#allocation1 + $0x2d] sm:$0xff]
    %v288 = vld [vmem:[#allocation1 + $0x36] sm:$0xff]
    %v289 = vld [vmem:[#allocation1 + $0x3f] sm:$0xff]
    %v562 = vunpack.c.l.b16 %v14
    %v563 = vunpack.c.l.b16 %v15
    %v564 = vunpack.c.l.b16 %v16
    %v565 = vunpack.c.l.b16 %v17
    %v566 = vunpack.c.l.b16 %v18
    %v567 = vunpack.c.l.b16 %v19
    %v568 = vunpack.c.l.b16 %v20
    %v569 = vunpack.c.l.b16 %v21
    %v570 = vunpack.c.l.b16 %v22
    %v571 = vunpack.c.l.b16 %v23
    %v572 = vunpack.c.l.b16 %v24
    %v573 = vunpack.c.l.b16 %v25
    %v574 = vunpack.c.l.b16 %v26
    %v575 = vunpack.c.l.b16 %v27
    %v576 = vunpack.c.l.b16 %v28
    %v577 = vunpack.c.l.b16 %v29
    %v578 = vunpack.c.l.b16 %v30
    %v579 = vunpack.c.l.b16 %v31
    %v580 = vunpack.c.l.b16 %v32
    %v581 = vunpack.c.l.b16 %v33
    %v582 = vunpack.c.l.b16 %v34
    %v583 = vunpack.c.l.b16 %v35
    %v584 = vunpack.c.l.b16 %v36
    %v585 = vunpack.c.l.b16 %v37
    %v586 = vunpack.c.l.b16 %v38
    %v587 = vunpack.c.l.b16 %v39
    %v588 = vunpack.c.l.b16 %v40
    %v589 = vunpack.c.l.b16 %v41
    %v590 = vunpack.c.l.b16 %v42
    %v591 = vunpack.c.l.b16 %v43
    %v592 = vunpack.c.l.b16 %v44
    %v593 = vunpack.c.l.b16 %v45
    %v594 = vunpack.c.l.b16 %v46
    %v595 = vunpack.c.l.b16 %v47
    %v596 = vunpack.c.l.b16 %v48
    %v597 = vunpack.c.l.b16 %v49
    %v598 = vunpack.c.l.b16 %v50
    %v599 = vunpack.c.l.b16 %v51
    %v600 = vunpack.c.l.b16 %v52
    %v601 = vunpack.c.l.b16 %v53
    %v602 = vunpack.c.l.b16 %v54
    %v603 = vunpack.c.l.b16 %v55
    %v604 = vunpack.c.l.b16 %v56
    %v605 = vunpack.c.l.b16 %v57
    %v606 = vunpack.c.l.b16 %v58
    %v607 = vunpack.c.l.b16 %v59
    %v608 = vunpack.c.l.b16 %v60
    %v609 = vunpack.c.l.b16 %v61
    %v610 = vunpack.c.l.b16 %v62
    %v611 = vunpack.c.l.b16 %v63
    %v612 = vunpack.c.l.b16 %v64
    %v613 = vunpack.c.l.b16 %v65
    %v614 = vunpack.c.l.b16 %v66
    %v615 = vunpack.c.l.b16 %v67
    %v616 = vunpack.c.l.b16 %v68
    %v617 = vunpack.c.l.b16 %v69
    %v618 = vunpack.c.l.b16 %v70
    %v619 = vunpack.c.l.b16 %v71
    %v620 = vunpack.c.l.b16 %v72
    %v621 = vunpack.c.l.b16 %v73
    %v622 = vunpack.c.l.b16 %v74
    %v623 = vunpack.c.l.b16 %v75
    %v624 = vunpack.c.l.b16 %v76
    %v625 = vunpack.c.l.b16 %v77
    %v626 = vunpack.c.l.b16 %v78
    %v627 = vunpack.c.l.b16 %v79
    %v628 = vunpack.c.l.b16 %v80
    %v629 = vunpack.c.l.b16 %v81
    %v630 = vunpack.c.l.b16 %v82
    %v631 = vunpack.c.l.b16 %v83
    %v632 = vunpack.c.l.b16 %v84
    %v633 = vunpack.c.l.b16 %v85
    %v634 = vunpack.c.l.b16 %v86
    %v635 = vunpack.c.l.b16 %v87
    %v636 = vunpack.c.l.b16 %v88
    %v637 = vunpack.c.l.b16 %v89
    %v638 = vunpack.c.l.b16 %v90
    %v639 = vunpack.c.l.b16 %v91
    %v640 = vunpack.c.l.b16 %v92
    %v641 = vunpack.c.l.b16 %v93
    %v642 = vunpack.c.l.b16 %v94
    %v643 = vunpack.c.l.b16 %v95
    %v644 = vunpack.c.l.b16 %v96
    %v645 = vunpack.c.l.b16 %v97
    %v646 = vunpack.c.l.b16 %v98
    %v647 = vunpack.c.l.b16 %v99
    %v648 = vunpack.c.l.b16 %v100
    %v649 = vunpack.c.l.b16 %v101
    %v650 = vunpack.c.l.b16 %v102
    %v651 = vunpack.c.l.b16 %v103
    %v652 = vunpack.c.l.b16 %v104
    %v653 = vunpack.c.l.b16 %v105
    %v654 = vunpack.c.l.b16 %v106
    %v655 = vunpack.c.l.b16 %v107
    %v656 = vunpack.c.l.b16 %v108
    %v657 = vunpack.c.l.b16 %v109
    %v658 = vunpack.c.l.b16 %v110
    %v659 = vunpack.c.l.b16 %v111
    %v660 = vunpack.c.l.b16 %v112
    %v661 = vunpack.c.l.b16 %v113
    %v662 = vunpack.c.l.b16 %v114
    %v663 = vunpack.c.l.b16 %v115
    %v664 = vunpack.c.l.b16 %v116
    %v665 = vunpack.c.l.b16 %v117
    %v666 = vunpack.c.l.b16 %v118
    %v667 = vunpack.c.l.b16 %v119
    %v668 = vunpack.c.l.b16 %v120
    %v669 = vunpack.c.l.b16 %v121
    %v670 = vunpack.c.l.b16 %v122
    %v671 = vunpack.c.l.b16 %v123
    %v672 = vunpack.c.l.b16 %v124
    %v673 = vunpack.c.l.b16 %v125
    %v674 = vunpack.c.l.b16 %v126
    %v675 = vunpack.c.l.b16 %v127
    %v676 = vunpack.c.l.b16 %v128
    %v677 = vunpack.c.l.b16 %v129
    %v678 = vunpack.c.l.b16 %v130
    %v679 = vunpack.c.l.b16 %v131
    %v680 = vunpack.c.l.b16 %v132
    %v681 = vunpack.c.l.b16 %v133
    %v682 = vunpack.c.l.b16 %v134
    %v683 = vunpack.c.l.b16 %v135
    %v684 = vunpack.c.l.b16 %v136
    %v685 = vunpack.c.l.b16 %v137
    %v686 = vunpack.c.l.b16 %v138
    %v687 = vunpack.c.l.b16 %v139
    %v688 = vunpack.c.l.b16 %v140
    %v689 = vunpack.c.l.b16 %v141
    %v690 = vunpack.c.l.b16 %v142
    %v691 = vunpack.c.l.b16 %v143
    %v692 = vunpack.c.l.b16 %v144
    %v693 = vunpack.c.l.b16 %v145
    %v694 = vunpack.c.l.b16 %v146
    %v695 = vunpack.c.l.b16 %v147
    %v696 = vunpack.c.l.b16 %v148
    %v697 = vunpack.c.l.b16 %v149
    %v698 = vunpack.c.l.b16 %v150
    %v699 = vunpack.c.l.b16 %v151
    %v700 = vunpack.c.l.b16 %v152
    %v701 = vunpack.c.l.b16 %v153
    %v702 = vunpack.c.l.b16 %v154
    %v703 = vunpack.c.l.b16 %v155
    %v704 = vunpack.c.l.b16 %v156
    %v705 = vunpack.c.l.b16 %v157
    %v706 = vunpack.c.l.b16 %v158
    %v707 = vunpack.c.l.b16 %v159
    %v708 = vunpack.c.l.b16 %v160
    %v709 = vunpack.c.l.b16 %v161
    %v710 = vunpack.c.l.b16 %v162
    %v711 = vunpack.c.l.b16 %v163
    %v712 = vunpack.c.l.b16 %v164
    %v713 = vunpack.c.l.b16 %v165
    %v714 = vunpack.c.l.b16 %v166
    %v715 = vunpack.c.l.b16 %v167
    %v716 = vunpack.c.l.b16 %v168
    %v717 = vunpack.c.l.b16 %v169
    %v718 = vunpack.c.l.b16 %v170
    %v719 = vunpack.c.l.b16 %v171
    %v720 = vunpack.c.l.b16 %v172
    %v721 = vunpack.c.l.b16 %v173
    %v722 = vunpack.c.l.b16 %v174
    %v723 = vunpack.c.l.b16 %v175
    %v724 = vunpack.c.l.b16 %v176
    %v725 = vunpack.c.l.b16 %v177
    %v726 = vunpack.c.l.b16 %v178
    %v727 = vunpack.c.l.b16 %v179
    %v728 = vunpack.c.l.b16 %v180
    %v729 = vunpack.c.l.b16 %v181
    %v730 = vunpack.c.l.b16 %v182
    %v731 = vunpack.c.l.b16 %v183
    %v732 = vunpack.c.l.b16 %v184
    %v733 = vunpack.c.l.b16 %v185
    %v734 = vunpack.c.l.b16 %v186
    %v735 = vunpack.c.l.b16 %v187
    %v736 = vunpack.c.l.b16 %v188
    %v737 = vunpack.c.l.b16 %v189
    %v738 = vunpack.c.l.b16 %v190
    %v739 = vunpack.c.l.b16 %v191
    %v740 = vunpack.c.l.b16 %v192
    %v741 = vunpack.c.l.b16 %v193
    %v742 = vunpack.c.l.b16 %v194
    %v743 = vunpack.c.l.b16 %v195
    %v744 = vunpack.c.l.b16 %v196
    %v745 = vunpack.c.l.b16 %v197
    %v746 = vunpack.c.l.b16 %v198
    %v747 = vunpack.c.l.b16 %v199
    %v748 = vunpack.c.l.b16 %v200
    %v749 = vunpack.c.l.b16 %v201
    %v750 = vunpack.c.l.b16 %v202
    %v751 = vunpack.c.l.b16 %v203
    %v752 = vunpack.c.l.b16 %v204
    %v753 = vunpack.c.l.b16 %v205
    %v754 = vunpack.c.l.b16 %v206
    %v755 = vunpack.c.l.b16 %v207
    %v756 = vunpack.c.l.b16 %v208
    %v757 = vunpack.c.l.b16 %v209
    %v758 = vunpack.c.l.b16 %v210
    %v759 = vunpack.c.l.b16 %v211
    %v760 = vunpack.c.l.b16 %v212
    %v761 = vunpack.c.l.b16 %v213
    %v762 = vunpack.c.l.b16 %v214
    %v763 = vunpack.c.l.b16 %v215
    %v764 = vunpack.c.l.b16 %v216
    %v765 = vunpack.c.l.b16 %v217
    %v766 = vunpack.c.l.b16 %v218
    %v767 = vunpack.c.l.b16 %v219
    %v768 = vunpack.c.l.b16 %v220
    %v769 = vunpack.c.l.b16 %v221
    %v770 = vunpack.c.l.b16 %v222
    %v771 = vunpack.c.l.b16 %v223
    %v772 = vunpack.c.l.b16 %v224
    %v773 = vunpack.c.l.b16 %v225
    %v774 = vunpack.c.l.b16 %v226
    %v775 = vunpack.c.l.b16 %v227
    %v776 = vunpack.c.l.b16 %v228
    %v777 = vunpack.c.l.b16 %v229
    %v778 = vunpack.c.l.b16 %v230
    %v779 = vunpack.c.l.b16 %v231
    %v780 = vunpack.c.l.b16 %v232
    %v781 = vunpack.c.l.b16 %v233
    %v782 = vunpack.c.l.b16 %v234
    %v783 = vunpack.c.l.b16 %v235
    %v784 = vunpack.c.l.b16 %v236
    %v785 = vunpack.c.l.b16 %v237
    %v786 = vunpack.c.l.b16 %v238
    %v787 = vunpack.c.l.b16 %v239
    %v788 = vunpack.c.l.b16 %v240
    %v789 = vunpack.c.l.b16 %v241
    %v790 = vunpack.c.l.b16 %v242
    %v791 = vunpack.c.l.b16 %v243
    %v792 = vunpack.c.l.b16 %v244
    %v793 = vunpack.c.l.b16 %v245
    %v794 = vunpack.c.l.b16 %v246
    %v795 = vunpack.c.l.b16 %v247
    %v796 = vunpack.c.l.b16 %v248
    %v797 = vunpack.c.l.b16 %v249
    %v798 = vunpack.c.l.b16 %v250
    %v799 = vunpack.c.l.b16 %v251
    %v800 = vunpack.c.l.b16 %v252
    %v801 = vunpack.c.l.b16 %v253
    %v802 = vunpack.c.l.b16 %v254
    %v803 = vunpack.c.l.b16 %v255
    %v804 = vunpack.c.l.b16 %v256
    %v805 = vunpack.c.l.b16 %v257
    %v806 = vunpack.c.l.b16 %v258
    %v807 = vunpack.c.l.b16 %v259
    %v808 = vunpack.c.l.b16 %v260
    %v809 = vunpack.c.l.b16 %v261
    %v810 = vunpack.c.l.b16 %v262
    %v811 = vunpack.c.l.b16 %v263
    %v812 = vunpack.c.l.b16 %v264
    %v813 = vunpack.c.l.b16 %v265
    %v814 = vunpack.c.l.b16 %v266
    %v815 = vunpack.c.l.b16 %v267
    %v816 = vunpack.c.l.b16 %v268
    %v817 = vunpack.c.l.b16 %v269
    %v818 = vpack.c.b16 %v563, %v562
    %v819 = vpack.c.b16 %v565, %v564
    %v820 = vpack.c.b16 %v567, %v566
    %v821 = vpack.c.b16 %v569, %v568
    %v822 = vpack.c.b16 %v571, %v570
    %v823 = vpack.c.b16 %v573, %v572
    %v824 = vpack.c.b16 %v575, %v574
    %v825 = vpack.c.b16 %v577, %v576
    %v826 = vpack.c.b16 %v579, %v578
    %v827 = vpack.c.b16 %v581, %v580
    %v828 = vpack.c.b16 %v583, %v582
    %v829 = vpack.c.b16 %v585, %v584
    %v830 = vpack.c.b16 %v587, %v586
    %v831 = vpack.c.b16 %v589, %v588
    %v832 = vpack.c.b16 %v591, %v590
    %v833 = vpack.c.b16 %v593, %v592
    %v834 = vpack.c.b16 %v595, %v594
    %v835 = vpack.c.b16 %v597, %v596
    %v836 = vpack.c.b16 %v599, %v598
    %v837 = vpack.c.b16 %v601, %v600
    %v838 = vpack.c.b16 %v603, %v602
    %v839 = vpack.c.b16 %v605, %v604
    %v840 = vpack.c.b16 %v607, %v606
    %v841 = vpack.c.b16 %v609, %v608
    %v842 = vpack.c.b16 %v611, %v610
    %v843 = vpack.c.b16 %v613, %v612
    %v844 = vpack.c.b16 %v615, %v614
    %v845 = vpack.c.b16 %v617, %v616
    %v846 = vpack.c.b16 %v619, %v618
    %v847 = vpack.c.b16 %v621, %v620
    %v848 = vpack.c.b16 %v623, %v622
    %v849 = vpack.c.b16 %v625, %v624
    %v850 = vpack.c.b16 %v627, %v626
    %v851 = vpack.c.b16 %v629, %v628
    %v852 = vpack.c.b16 %v631, %v630
    %v853 = vpack.c.b16 %v633, %v632
    %v854 = vpack.c.b16 %v635, %v634
    %v855 = vpack.c.b16 %v637, %v636
    %v856 = vpack.c.b16 %v639, %v638
    %v857 = vpack.c.b16 %v641, %v640
    %v858 = vpack.c.b16 %v643, %v642
    %v859 = vpack.c.b16 %v645, %v644
    %v860 = vpack.c.b16 %v647, %v646
    %v861 = vpack.c.b16 %v649, %v648
    %v862 = vpack.c.b16 %v651, %v650
    %v863 = vpack.c.b16 %v653, %v652
    %v864 = vpack.c.b16 %v655, %v654
    %v865 = vpack.c.b16 %v657, %v656
    %v866 = vpack.c.b16 %v659, %v658
    %v867 = vpack.c.b16 %v661, %v660
    %v868 = vpack.c.b16 %v663, %v662
    %v869 = vpack.c.b16 %v665, %v664
    %v870 = vpack.c.b16 %v667, %v666
    %v871 = vpack.c.b16 %v669, %v668
    %v872 = vpack.c.b16 %v671, %v670
    %v873 = vpack.c.b16 %v673, %v672
    %v874 = vpack.c.b16 %v675, %v674
    %v875 = vpack.c.b16 %v677, %v676
    %v876 = vpack.c.b16 %v679, %v678
    %v877 = vpack.c.b16 %v681, %v680
    %v878 = vpack.c.b16 %v683, %v682
    %v879 = vpack.c.b16 %v685, %v684
    %v880 = vpack.c.b16 %v687, %v686
    %v881 = vpack.c.b16 %v689, %v688
    %v882 = vpack.c.b16 %v691, %v690
    %v883 = vpack.c.b16 %v693, %v692
    %v884 = vpack.c.b16 %v695, %v694
    %v885 = vpack.c.b16 %v697, %v696
    %v886 = vpack.c.b16 %v699, %v698
    %v887 = vpack.c.b16 %v701, %v700
    %v888 = vpack.c.b16 %v703, %v702
    %v889 = vpack.c.b16 %v705, %v704
    %v890 = vpack.c.b16 %v707, %v706
    %v891 = vpack.c.b16 %v709, %v708
    %v892 = vpack.c.b16 %v711, %v710
    %v893 = vpack.c.b16 %v713, %v712
    %v894 = vpack.c.b16 %v715, %v714
    %v895 = vpack.c.b16 %v717, %v716
    %v896 = vpack.c.b16 %v719, %v718
    %v897 = vpack.c.b16 %v721, %v720
    %v898 = vpack.c.b16 %v723, %v722
    %v899 = vpack.c.b16 %v725, %v724
    %v900 = vpack.c.b16 %v727, %v726
    %v901 = vpack.c.b16 %v729, %v728
    %v902 = vpack.c.b16 %v731, %v730
    %v903 = vpack.c.b16 %v733, %v732
    %v904 = vpack.c.b16 %v735, %v734
    %v905 = vpack.c.b16 %v737, %v736
    %v906 = vpack.c.b16 %v739, %v738
    %v907 = vpack.c.b16 %v741, %v740
    %v908 = vpack.c.b16 %v743, %v742
    %v909 = vpack.c.b16 %v745, %v744
    %v910 = vpack.c.b16 %v747, %v746
    %v911 = vpack.c.b16 %v749, %v748
    %v912 = vpack.c.b16 %v751, %v750
    %v913 = vpack.c.b16 %v753, %v752
    %v914 = vpack.c.b16 %v755, %v754
    %v915 = vpack.c.b16 %v757, %v756
    %v916 = vpack.c.b16 %v759, %v758
    %v917 = vpack.c.b16 %v761, %v760
    %v918 = vpack.c.b16 %v763, %v762
    %v919 = vpack.c.b16 %v765, %v764
    %v920 = vpack.c.b16 %v767, %v766
    %v921 = vpack.c.b16 %v769, %v768
    %v922 = vpack.c.b16 %v771, %v770
    %v923 = vpack.c.b16 %v773, %v772
    %v924 = vpack.c.b16 %v775, %v774
    %v925 = vpack.c.b16 %v777, %v776
    %v926 = vpack.c.b16 %v779, %v778
    %v927 = vpack.c.b16 %v781, %v780
    %v928 = vpack.c.b16 %v783, %v782
    %v929 = vpack.c.b16 %v785, %v784
    %v930 = vpack.c.b16 %v787, %v786
    %v931 = vpack.c.b16 %v789, %v788
    %v932 = vpack.c.b16 %v791, %v790
    %v933 = vpack.c.b16 %v793, %v792
    %v934 = vpack.c.b16 %v795, %v794
    %v935 = vpack.c.b16 %v797, %v796
    %v936 = vpack.c.b16 %v799, %v798
    %v937 = vpack.c.b16 %v801, %v800
    %v938 = vpack.c.b16 %v803, %v802
    %v939 = vpack.c.b16 %v805, %v804
    %v940 = vpack.c.b16 %v807, %v806
    %v941 = vpack.c.b16 %v809, %v808
    %v942 = vpack.c.b16 %v811, %v810
    %v943 = vpack.c.b16 %v813, %v812
    %v944 = vpack.c.b16 %v815, %v814
    %v945 = vpack.c.b16 %v817, %v816
    %1074 = vmatpush.bf16.msra.mxu0 %v825
    %1075 = vmatpush.bf16.msra.mxu0 %v824
    %1076 = vmatpush.bf16.msra.mxu0 %v823
    %1077 = vmatpush.bf16.msra.mxu0 %v822
    %1078 = vmatpush.bf16.msra.mxu0 %v821
    %1079 = vmatpush.bf16.msra.mxu0 %v820
    %1080 = vmatpush.bf16.msra.mxu0 %v819
    %1081 = vmatpush.bf16.msra.mxu0 %v818
    %1082 = vmatmul.bf16.gmra.mxu0 %v272
    %v1083 = vpop.f32.mrf.mxu0
    %v1084 = vadd.f32 0.0, %v1083
    %v1085 = vpop.f32.mrf.mxu0
    %1086 = vdwg.mxu0
    %1087 = vmatpush.bf16.msra.mxu0 %v833
    %1088 = vmatpush.bf16.msra.mxu0 %v832
    %1089 = vmatpush.bf16.msra.mxu0 %v831
    %1090 = vmatpush.bf16.msra.mxu0 %v830
    %1091 = vmatpush.bf16.msra.mxu0 %v829
    %1092 = vmatpush.bf16.msra.mxu0 %v828
    %1093 = vmatpush.bf16.msra.mxu0 %v827
    %1094 = vmatpush.bf16.msra.mxu0 %v826
    %1095 = vmatmul.bf16.gmra.mxu0 %v273
    %v1096 = vpop.f32.mrf.mxu0
    %v1097 = vadd.f32 %v1084, %v1096
    %v1098 = vpop.f32.mrf.mxu0
    %1099 = vdwg.mxu0
    %1100 = vmatpush.bf16.msra.mxu0 %v841
    %1101 = vmatpush.bf16.msra.mxu0 %v840
    %1102 = vmatpush.bf16.msra.mxu0 %v839
    %1103 = vmatpush.bf16.msra.mxu0 %v838
    %1104 = vmatpush.bf16.msra.mxu0 %v837
    %1105 = vmatpush.bf16.msra.mxu0 %v836
    %1106 = vmatpush.bf16.msra.mxu0 %v835
    %1107 = vmatpush.bf16.msra.mxu0 %v834
    %1108 = vmatmul.bf16.gmra.mxu0 %v274
    %v1109 = vpop.f32.mrf.mxu0
    %v1110 = vadd.f32 %v1097, %v1109
    %v1111 = vpop.f32.mrf.mxu0
    %1112 = vdwg.mxu0
    %1113 = vmatpush.bf16.msra.mxu0 %v849
    %1114 = vmatpush.bf16.msra.mxu0 %v848
    %1115 = vmatpush.bf16.msra.mxu0 %v847
    %1116 = vmatpush.bf16.msra.mxu0 %v846
    %1117 = vmatpush.bf16.msra.mxu0 %v845
    %1118 = vmatpush.bf16.msra.mxu0 %v844
    %1119 = vmatpush.bf16.msra.mxu0 %v843
    %1120 = vmatpush.bf16.msra.mxu0 %v842
    %1121 = vmatmul.bf16.gmra.mxu0 %v275
    %v1122 = vpop.f32.mrf.mxu0
    %v1123 = vadd.f32 %v1110, %v1122
    %v1124 = vpop.f32.mrf.mxu0
    %1125 = vdwg.mxu0
    %1126 = vmatpush.bf16.msra.mxu0 %v857
    %1127 = vmatpush.bf16.msra.mxu0 %v856
    %1128 = vmatpush.bf16.msra.mxu0 %v855
    %1129 = vmatpush.bf16.msra.mxu0 %v854
    %1130 = vmatpush.bf16.msra.mxu0 %v853
    %1131 = vmatpush.bf16.msra.mxu0 %v852
    %1132 = vmatpush.bf16.msra.mxu0 %v851
    %1133 = vmatpush.bf16.msra.mxu0 %v850
    %1134 = vmatmul.bf16.gmra.mxu0 %v276
    %v1135 = vpop.f32.mrf.mxu0
    %v1136 = vadd.f32 %v1123, %v1135
    %v1137 = vpop.f32.mrf.mxu0
    %1138 = vdwg.mxu0
    %1139 = vmatpush.bf16.msra.mxu0 %v865
    %1140 = vmatpush.bf16.msra.mxu0 %v864
    %1141 = vmatpush.bf16.msra.mxu0 %v863
    %1142 = vmatpush.bf16.msra.mxu0 %v862
    %1143 = vmatpush.bf16.msra.mxu0 %v861
    %1144 = vmatpush.bf16.msra.mxu0 %v860
    %1145 = vmatpush.bf16.msra.mxu0 %v859
    %1146 = vmatpush.bf16.msra.mxu0 %v858
    %1147 = vmatmul.bf16.gmra.mxu0 %v277
    %v1148 = vpop.f32.mrf.mxu0
    %v1149 = vadd.f32 %v1136, %v1148
    %v1150 = vpop.f32.mrf.mxu0
    %1151 = vdwg.mxu0
    %1152 = vmatpush.bf16.msra.mxu0 %v873
    %1153 = vmatpush.bf16.msra.mxu0 %v872
    %1154 = vmatpush.bf16.msra.mxu0 %v871
    %1155 = vmatpush.bf16.msra.mxu0 %v870
    %1156 = vmatpush.bf16.msra.mxu0 %v869
    %1157 = vmatpush.bf16.msra.mxu0 %v868
    %1158 = vmatpush.bf16.msra.mxu0 %v867
    %1159 = vmatpush.bf16.msra.mxu0 %v866
    %1160 = vmatmul.bf16.gmra.mxu0 %v278
    %v1161 = vpop.f32.mrf.mxu0
    %v1162 = vadd.f32 %v1149, %v1161
    %v1163 = vpop.f32.mrf.mxu0
    %1164 = vdwg.mxu0
    %1165 = vmatpush.bf16.msra.mxu0 %v881
    %1166 = vmatpush.bf16.msra.mxu0 %v880
    %1167 = vmatpush.bf16.msra.mxu0 %v879
    %1168 = vmatpush.bf16.msra.mxu0 %v878
    %1169 = vmatpush.bf16.msra.mxu0 %v877
    %1170 = vmatpush.bf16.msra.mxu0 %v876
    %1171 = vmatpush.bf16.msra.mxu0 %v875
    %1172 = vmatpush.bf16.msra.mxu0 %v874
    %1173 = vmatmul.bf16.gmra.mxu0 %v279
    %v1174 = vpop.f32.mrf.mxu0
    %v1175 = vadd.f32 %v1162, %v1174
    %v1176 = vpop.f32.mrf.mxu0
    %1177 = vdwg.mxu0
    %1178 = vmatpush.bf16.msra.mxu0 %v889
    %1179 = vmatpush.bf16.msra.mxu0 %v888
    %1180 = vmatpush.bf16.msra.mxu0 %v887
    %1181 = vmatpush.bf16.msra.mxu0 %v886
    %1182 = vmatpush.bf16.msra.mxu0 %v885
    %1183 = vmatpush.bf16.msra.mxu0 %v884
    %1184 = vmatpush.bf16.msra.mxu0 %v883
    %1185 = vmatpush.bf16.msra.mxu0 %v882
    %1186 = vmatmul.bf16.gmra.mxu0 %v282
    %v1187 = vpop.f32.mrf.mxu0
    %v1188 = vadd.f32 %v1175, %v1187
    %v1189 = vpop.f32.mrf.mxu0
    %1190 = vdwg.mxu0
    %1191 = vmatpush.bf16.msra.mxu0 %v897
    %1192 = vmatpush.bf16.msra.mxu0 %v896
    %1193 = vmatpush.bf16.msra.mxu0 %v895
    %1194 = vmatpush.bf16.msra.mxu0 %v894
    %1195 = vmatpush.bf16.msra.mxu0 %v893
    %1196 = vmatpush.bf16.msra.mxu0 %v892
    %1197 = vmatpush.bf16.msra.mxu0 %v891
    %1198 = vmatpush.bf16.msra.mxu0 %v890
    %1199 = vmatmul.bf16.gmra.mxu0 %v283
    %v1200 = vpop.f32.mrf.mxu0
    %v1201 = vadd.f32 %v1188, %v1200
    %v1202 = vpop.f32.mrf.mxu0
    %1203 = vdwg.mxu0
    %1204 = vmatpush.bf16.msra.mxu0 %v905
    %1205 = vmatpush.bf16.msra.mxu0 %v904
    %1206 = vmatpush.bf16.msra.mxu0 %v903
    %1207 = vmatpush.bf16.msra.mxu0 %v902
    %1208 = vmatpush.bf16.msra.mxu0 %v901
    %1209 = vmatpush.bf16.msra.mxu0 %v900
    %1210 = vmatpush.bf16.msra.mxu0 %v899
    %1211 = vmatpush.bf16.msra.mxu0 %v898
    %1212 = vmatmul.bf16.gmra.mxu0 %v284
    %v1213 = vpop.f32.mrf.mxu0
    %v1214 = vadd.f32 %v1201, %v1213
    %v1215 = vpop.f32.mrf.mxu0
    %1216 = vdwg.mxu0
    %1217 = vmatpush.bf16.msra.mxu0 %v913
    %1218 = vmatpush.bf16.msra.mxu0 %v912
    %1219 = vmatpush.bf16.msra.mxu0 %v911
    %1220 = vmatpush.bf16.msra.mxu0 %v910
    %1221 = vmatpush.bf16.msra.mxu0 %v909
    %1222 = vmatpush.bf16.msra.mxu0 %v908
    %1223 = vmatpush.bf16.msra.mxu0 %v907
    %1224 = vmatpush.bf16.msra.mxu0 %v906
    %1225 = vmatmul.bf16.gmra.mxu0 %v285
    %v1226 = vpop.f32.mrf.mxu0
    %v1227 = vadd.f32 %v1214, %v1226
    %v1228 = vpop.f32.mrf.mxu0
    %1229 = vdwg.mxu0
    %1230 = vmatpush.bf16.msra.mxu0 %v921
    %1231 = vmatpush.bf16.msra.mxu0 %v920
    %1232 = vmatpush.bf16.msra.mxu0 %v919
    %1233 = vmatpush.bf16.msra.mxu0 %v918
    %1234 = vmatpush.bf16.msra.mxu0 %v917
    %1235 = vmatpush.bf16.msra.mxu0 %v916
    %1236 = vmatpush.bf16.msra.mxu0 %v915
    %1237 = vmatpush.bf16.msra.mxu0 %v914
    %1238 = vmatmul.bf16.gmra.mxu0 %v286
    %v1239 = vpop.f32.mrf.mxu0
    %v1240 = vadd.f32 %v1227, %v1239
    %v1241 = vpop.f32.mrf.mxu0
    %1242 = vdwg.mxu0
    %1243 = vmatpush.bf16.msra.mxu0 %v929
    %1244 = vmatpush.bf16.msra.mxu0 %v928
    %1245 = vmatpush.bf16.msra.mxu0 %v927
    %1246 = vmatpush.bf16.msra.mxu0 %v926
    %1247 = vmatpush.bf16.msra.mxu0 %v925
    %1248 = vmatpush.bf16.msra.mxu0 %v924
    %1249 = vmatpush.bf16.msra.mxu0 %v923
    %1250 = vmatpush.bf16.msra.mxu0 %v922
    %1251 = vmatmul.bf16.gmra.mxu0 %v287
    %v1252 = vpop.f32.mrf.mxu0
    %v1253 = vadd.f32 %v1240, %v1252
    %v1254 = vpop.f32.mrf.mxu0
    %1255 = vdwg.mxu0
    %1256 = vmatpush.bf16.msra.mxu0 %v937
    %1257 = vmatpush.bf16.msra.mxu0 %v936
    %1258 = vmatpush.bf16.msra.mxu0 %v935
    %1259 = vmatpush.bf16.msra.mxu0 %v934
    %1260 = vmatpush.bf16.msra.mxu0 %v933
    %1261 = vmatpush.bf16.msra.mxu0 %v932
    %1262 = vmatpush.bf16.msra.mxu0 %v931
    %1263 = vmatpush.bf16.msra.mxu0 %v930
    %1264 = vmatmul.bf16.gmra.mxu0 %v288
    %v1265 = vpop.f32.mrf.mxu0
    %v1266 = vadd.f32 %v1253, %v1265
    %v1267 = vpop.f32.mrf.mxu0
    %1268 = vdwg.mxu0
    %1269 = vmatpush.bf16.msra.mxu0 %v945
    %1270 = vmatpush.bf16.msra.mxu0 %v944
    %1271 = vmatpush.bf16.msra.mxu0 %v943
    %1272 = vmatpush.bf16.msra.mxu0 %v942
    %1273 = vmatpush.bf16.msra.mxu0 %v941
    %1274 = vmatpush.bf16.msra.mxu0 %v940
    %1275 = vmatpush.bf16.msra.mxu0 %v939
    %1276 = vmatpush.bf16.msra.mxu0 %v938
    %1277 = vmatmul.bf16.gmra.mxu0 %v289
    %v1278 = vpop.f32.mrf.mxu0
    %v1279 = vadd.f32 %v1266, %v1278
    %v1280 = vpop.f32.mrf.mxu0
    %1281 = vdwg.mxu0
    %v1282 = vxor.u32 %v1279, 2147483648
    %v1283 = vmul.f32 %v1282, 1.442695
    %v1284 = vpow.pop %v1283
    %v1285 = vadd.f32 %v1284, 1.0
    %v1286 = vrcp.pop %v1285
    %v1287 = vmul.f32 %v1285, %v1286
    %v1288 = vsub.f32 1.0, %v1287
    %v1289 = vmul.f32 %v1286, %v1288
    %v1290 = vadd.f32 %v1286, %v1289
    %vm1291 = vweird.f32 %v1285
    %vm1292 = vweird.f32 %v1286
    %vm1293 = vmor %vm1291, %vm1292
    %v1294 = vsel %vm1293, %v1286, %v1290
    %v1295 = vand.u32 2147483647, %v1285
    %vm1296 = vcmp.eq.f32.partialorder %v1295, 8.507059e+37
    %v1297 = vand.u32 %v1285, 2147483648
    %v1298 = vor.u32 1.1754944e-38, %v1297
    %v1299 = vsel %vm1296, %v1298, %v1294
    %v1300 = vmul.f32 1.0, %v1299
    %1301 = vst [vmem:[#allocation2] sm:$0x3] %v1300
    // Predicated region
    $region10: #{encoders_forward.9} parent=1 // pred_check
      _
    $region11: #{encoders_forward.9} parent=1 // pred_check_branch
      %1303 = sbr.rel (0) target = $region13
    $region12: #{encoders_forward.9} parent=1 // pred_region
      %1305 = vsyncadd [#allocation3], 0
      %s1307 = sshll.u32 [#allocation2], 4
      %s1308 = int_to_ptr.vmem [resolvable:$true] %s1307
      %s1309 = sshll.u32 %s2, 4
      %s1310 = int_to_ptr.hbm [resolvable:$true] %s1309
      %1312 = dma.vmem_to_hbm [thread:$0]  %s1308, 32, %s1310, [#allocation3]
    $region13: #{encoders_forward.9} parent=1 // pred_fallthru
      _
    // Predicated region
    $region14: #{encoders_forward.9} parent=1 // pred_check
      _
    $region15: #{encoders_forward.9} parent=1 // pred_check_branch
      %1314 = sbr.rel (0) target = $region17
    $region16: #{encoders_forward.9} parent=1 // pred_region
      %1316 = dma.done [#allocation3], 32
    $region17: #{encoders_forward.9} parent=1 // pred_fallthru
      _
    %1317 = vsyncpa [#allocation3], 1

</llo_original>
